<compile_context>
chip_gen: v7x
topology: tpu7x:2x2x1
jax: 0.10.0
libtpu: 0.0.40
codegen_flags: <defaults>
</compile_context>

<pallas_src>
import numpy as np
import jax
import jax.numpy as jnp
from jax.experimental import pallas as pl
from jax.experimental.pallas import tpu as pltpu


def create_log_gabor_filters(num_filters, filter_length, audio_channels, sample_rate):
    """Deterministic re-implementation of LogGaborFilterBank._create_filters.

    Returns filters of shape (num_filters, audio_channels, filter_length), float32.
    """
    min_cf = 50
    max_cf = sample_rate // 2
    bandwidth = 1
    center_frequencies = np.geomspace(min_cf, max_cf, num_filters)
    filters = np.zeros((num_filters, audio_channels, filter_length), dtype=np.float32)
    for c in range(audio_channels):
        for i, freq in enumerate(center_frequencies):
            t = np.linspace((-filter_length) // 2, filter_length // 2,
                            filter_length) / sample_rate
            omega = 2.0 * np.pi * freq
            sigma = freq / bandwidth
            with np.errstate(divide="ignore", invalid="ignore"):
                lg = np.exp(-(np.log(omega * t) - np.log(freq)) ** 2
                            / (2.0 * np.log(sigma) ** 2))
            # log of non-positive times -> nan/inf; zero them.
            lg = np.nan_to_num(lg, nan=0.0, posinf=0.0, neginf=0.0)
            lg[filter_length // 2] = 0.0
            # TODO(synk): original uses deprecated torch.ifft with an invalid
            # signature; we use numpy ifft and keep the real part.
            lg_time = np.fft.ifft(lg, n=filter_length)
            filters[i, c, :] = lg_time.real.astype(np.float32)
    return filters


def _choose_batch_tile(N, L, K, T, F,
                       vmem_budget_bytes=12 * 1024 * 1024,
                       vreg_budget=48):
    """Number of batch rows fused per grid step.

    Bounded by (a) a VMEM budget for the double-buffered input + output block
    and (b) a vreg budget for the F precomputed tap slabs that stay live across
    the K-filter MAC loop.  When tiling (Nb < N) the result is a multiple of 8
    so the (Nb, L) input block keeps dense sublanes.  No forced multi-step
    split: on single-TC chips extra grid steps are pure overhead.
    """
    per_item_bytes = 4 * (L + K * T) * 2            # f32, x2 for double buffering
    nb_vmem = max(1, vmem_budget_bytes // max(per_item_bytes, 1))
    # vregs live per 8 fused rows: (F taps + x + acc) slabs of (8, max(T, L)) f32.
    vregs_per_8rows = (F + 2) * pl.cdiv(max(T, L), 128)
    nb_vreg = max(8, 8 * (vreg_budget // max(vregs_per_8rows, 1)))
    nb = min(N, nb_vmem, nb_vreg)
    if nb >= N or N < 8:
        return N                                    # single dense block of all rows
    return max(8, (nb // 8) * 8)                    # sublane-dense tile; cdiv grid


def _make_kernel(num_filters, filter_length, pad, sig_len, out_len):
    K, F, P, L, T = num_filters, filter_length, pad, sig_len, out_len

    def kernel(w_sref, x_ref, o_ref):
        # w_sref: (K, F) filter bank in SMEM (scalar reads -> sreg splat MAC)
        # x_ref:  (Nb, L) dense signal block (batch on sublanes, time on lanes)
        # o_ref:  (Nb, K, T) conv1d output block (cross-correlation, 'same' pad)
        x = x_ref[...]                                          # (Nb, L) f32
        lane = jax.lax.broadcasted_iota(jnp.int32, x.shape, 1)  # (Nb, L)

        # Precompute the F shifted + halo-masked tap slabs once (hoisted out of
        # the K x F MAC loop).  T == L for odd F with 'same' padding, so the
        # circular roll only needs the edge lanes zeroed.
        taps = []
        for f in range(F):
            d = f - P                                           # tap offset [-P, P]
            if d == 0:
                taps.append(x)
            else:
                shifted = pltpu.roll(x, shift=(-d) % L, axis=1)  # x[n, t + d] (circular)
                valid = jnp.logical_and(lane + d >= 0, lane + d < L)
                taps.append(jnp.where(valid, shifted, 0.0))

        # Pure-VALU MAC with scalar weight broadcasts; no in-kernel lane
        # extracts or broadcast_in_dim.  K*F = small static unroll.
        for k in range(K):
            acc = taps[0] * w_sref[k, 0]
            for f in range(1, F):
                acc = acc + taps[f] * w_sref[k, f]
            o_ref[:, k, :] = acc.astype(o_ref.dtype)

    return kernel


def log_gabor_forward(x, filters):
    """Pallas equivalent of LogGaborFilterBank.forward.

    Args:
      x:       (batch, audio_channels, signal_length) float32
      filters: (num_filters, audio_channels, filter_length) float32
               (audio_channels must be 1, exactly as the PyTorch module implies).

    Returns:
      (batch, num_filters * audio_channels, output_length) float32
    """
    B, C, L = x.shape
    K, Cin, F = filters.shape
    assert Cin == C == 1, "forward() is only well-defined for audio_channels == 1"
    assert F % 2 == 1, "odd filter_length assumed ('same' padding / center tap)"
    P = F // 2
    T = L + 2 * P - F + 1                 # conv1d output length (== L for odd F)
    N = B * C

    xr = x.reshape(N, L)                  # dense 2-D layout: rows on sublanes
    w = filters[:, 0, :]                  # (K, F) scalar table -> SMEM

    Nb = _choose_batch_tile(N, L, K, T, F)
    grid = (pl.cdiv(N, Nb),)              # masked tail block if Nb does not divide N

    kernel = _make_kernel(K, F, P, L, T)

    cost = pl.CostEstimate(
        flops=2 * N * K * F * T,
        transcendentals=0,
        bytes_accessed=4 * (N * L + K * F + N * K * T),
    )

    y = pl.pallas_call(
        kernel,
        out_shape=jax.ShapeDtypeStruct((N, K, T), x.dtype),
        grid=grid,
        in_specs=[
            pl.BlockSpec(memory_space=pltpu.MemorySpace.SMEM),   # (K, F) weights
            pl.BlockSpec((Nb, L), lambda i: (i, 0)),             # (Nb, L) signal rows
        ],
        out_specs=pl.BlockSpec((Nb, K, T), lambda i: (i, 0, 0)),
        compiler_params=pltpu.CompilerParams(
            dimension_semantics=("parallel",),
            vmem_limit_bytes=32 * 1024 * 1024,
        ),
        cost_estimate=cost,
    )(w, xr)

    return y.reshape(B, K * C, T)


if __name__ == "__main__":
    # Small shapes consistent with the module's forward.
    batch = 4
    audio_channels = 1
    num_filters = 16
    filter_length = 9
    signal_length = 256
    sample_rate = 16000

    filters_np = create_log_gabor_filters(
        num_filters, filter_length, audio_channels, sample_rate)
    filters = jnp.asarray(filters_np)

    key = jax.random.PRNGKey(0)
    x = jax.random.normal(
        key, (batch, audio_channels, signal_length), dtype=jnp.float32)

    out = jax.block_until_ready(log_gabor_forward(x, filters))

    # Reference check with lax (cross-correlation, same as torch.conv1d).
    P = filter_length // 2
    xr = x.reshape(batch * audio_channels, 1, signal_length)
    ref = jax.lax.conv_general_dilated(
        xr, filters, window_strides=(1,), padding=[(P, P)],
        dimension_numbers=("NCH", "OIH", "NCH"))
    ref = ref.reshape(batch, num_filters * audio_channels, ref.shape[-1])

    assert out.shape == (batch, num_filters * audio_channels,
                         signal_length + 2 * P - filter_length + 1), out.shape
    np.testing.assert_allclose(np.asarray(out), np.asarray(ref),
                               rtol=1e-5, atol=1e-5)

    print("KERNEL_OK")
</pallas_src>

<mosaic_0001>
module attributes {stable_mosaic.version = 11 : i64} {
  func.func @kernel(%arg0: i32, %arg1: memref<16x9xf32, #tpu.memory_space<smem>>, %arg2: memref<4x256xf32, #tpu.memory_space<vmem>>, %arg3: memref<4x16x256xf32, #tpu.memory_space<vmem>>) attributes {dimension_semantics = [#tpu.dimension_semantics<parallel>], iteration_bounds = array<i64: 1>, scalar_prefetch = 0 : i64, scratch_operands = 0 : i64, tpu.core_type = #tpu.core_type<tc>, window_params = [{transform_indices = @transform_0, window_bounds = array<i64: 16, 9>}, {transform_indices = @transform_1, window_bounds = array<i64: 4, 256>}, {transform_indices = @transform_2, window_bounds = array<i64: 4, 16, 256>}]} {
    %c0 = arith.constant 0 : index
    %c0_0 = arith.constant 0 : index
    %0 = vector.load %arg2[%c0, %c0_0] : memref<4x256xf32, #tpu.memory_space<vmem>>, vector<4x256xf32>
    %1 = tpu.iota {dimensions = array<i32: 1>} : vector<4x256xi32>
    %c4_i32 = arith.constant 4 : i32
    %2 = tpu.dynamic_rotate %0 by %c4_i32 dim 1 : vector<4x256xf32>, i32 -> vector<4x256xf32>
    %c-4_i32 = arith.constant -4 : i32
    %3 = vector.broadcast %c-4_i32 : i32 to vector<4x256xi32>
    %4 = arith.addi %1, %3 : vector<4x256xi32>
    %c0_i32 = arith.constant 0 : i32
    %5 = vector.broadcast %c0_i32 : i32 to vector<4x256xi32>
    %6 = arith.cmpi sge, %4, %5 : vector<4x256xi32>
    %c-4_i32_1 = arith.constant -4 : i32
    %7 = vector.broadcast %c-4_i32_1 : i32 to vector<4x256xi32>
    %8 = arith.addi %1, %7 : vector<4x256xi32>
    %c256_i32 = arith.constant 256 : i32
    %9 = vector.broadcast %c256_i32 : i32 to vector<4x256xi32>
    %10 = arith.cmpi slt, %8, %9 : vector<4x256xi32>
    %11 = arith.andi %6, %10 : vector<4x256xi1>
    %cst = arith.constant 0.000000e+00 : f32
    %12 = vector.broadcast %cst : f32 to vector<4x256xf32>
    %13 = arith.select %11, %2, %12 : vector<4x256xi1>, vector<4x256xf32>
    %c3_i32 = arith.constant 3 : i32
    %14 = tpu.dynamic_rotate %0 by %c3_i32 dim 1 : vector<4x256xf32>, i32 -> vector<4x256xf32>
    %c-3_i32 = arith.constant -3 : i32
    %15 = vector.broadcast %c-3_i32 : i32 to vector<4x256xi32>
    %16 = arith.addi %1, %15 : vector<4x256xi32>
    %c0_i32_2 = arith.constant 0 : i32
    %17 = vector.broadcast %c0_i32_2 : i32 to vector<4x256xi32>
    %18 = arith.cmpi sge, %16, %17 : vector<4x256xi32>
    %c-3_i32_3 = arith.constant -3 : i32
    %19 = vector.broadcast %c-3_i32_3 : i32 to vector<4x256xi32>
    %20 = arith.addi %1, %19 : vector<4x256xi32>
    %c256_i32_4 = arith.constant 256 : i32
    %21 = vector.broadcast %c256_i32_4 : i32 to vector<4x256xi32>
    %22 = arith.cmpi slt, %20, %21 : vector<4x256xi32>
    %23 = arith.andi %18, %22 : vector<4x256xi1>
    %cst_5 = arith.constant 0.000000e+00 : f32
    %24 = vector.broadcast %cst_5 : f32 to vector<4x256xf32>
    %25 = arith.select %23, %14, %24 : vector<4x256xi1>, vector<4x256xf32>
    %c2_i32 = arith.constant 2 : i32
    %26 = tpu.dynamic_rotate %0 by %c2_i32 dim 1 : vector<4x256xf32>, i32 -> vector<4x256xf32>
    %c-2_i32 = arith.constant -2 : i32
    %27 = vector.broadcast %c-2_i32 : i32 to vector<4x256xi32>
    %28 = arith.addi %1, %27 : vector<4x256xi32>
    %c0_i32_6 = arith.constant 0 : i32
    %29 = vector.broadcast %c0_i32_6 : i32 to vector<4x256xi32>
    %30 = arith.cmpi sge, %28, %29 : vector<4x256xi32>
    %c-2_i32_7 = arith.constant -2 : i32
    %31 = vector.broadcast %c-2_i32_7 : i32 to vector<4x256xi32>
    %32 = arith.addi %1, %31 : vector<4x256xi32>
    %c256_i32_8 = arith.constant 256 : i32
    %33 = vector.broadcast %c256_i32_8 : i32 to vector<4x256xi32>
    %34 = arith.cmpi slt, %32, %33 : vector<4x256xi32>
    %35 = arith.andi %30, %34 : vector<4x256xi1>
    %cst_9 = arith.constant 0.000000e+00 : f32
    %36 = vector.broadcast %cst_9 : f32 to vector<4x256xf32>
    %37 = arith.select %35, %26, %36 : vector<4x256xi1>, vector<4x256xf32>
    %c1_i32 = arith.constant 1 : i32
    %38 = tpu.dynamic_rotate %0 by %c1_i32 dim 1 : vector<4x256xf32>, i32 -> vector<4x256xf32>
    %c-1_i32 = arith.constant -1 : i32
    %39 = vector.broadcast %c-1_i32 : i32 to vector<4x256xi32>
    %40 = arith.addi %1, %39 : vector<4x256xi32>
    %c0_i32_10 = arith.constant 0 : i32
    %41 = vector.broadcast %c0_i32_10 : i32 to vector<4x256xi32>
    %42 = arith.cmpi sge, %40, %41 : vector<4x256xi32>
    %c-1_i32_11 = arith.constant -1 : i32
    %43 = vector.broadcast %c-1_i32_11 : i32 to vector<4x256xi32>
    %44 = arith.addi %1, %43 : vector<4x256xi32>
    %c256_i32_12 = arith.constant 256 : i32
    %45 = vector.broadcast %c256_i32_12 : i32 to vector<4x256xi32>
    %46 = arith.cmpi slt, %44, %45 : vector<4x256xi32>
    %47 = arith.andi %42, %46 : vector<4x256xi1>
    %cst_13 = arith.constant 0.000000e+00 : f32
    %48 = vector.broadcast %cst_13 : f32 to vector<4x256xf32>
    %49 = arith.select %47, %38, %48 : vector<4x256xi1>, vector<4x256xf32>
    %c255_i32 = arith.constant 255 : i32
    %50 = tpu.dynamic_rotate %0 by %c255_i32 dim 1 : vector<4x256xf32>, i32 -> vector<4x256xf32>
    %c1_i32_14 = arith.constant 1 : i32
    %51 = vector.broadcast %c1_i32_14 : i32 to vector<4x256xi32>
    %52 = arith.addi %1, %51 : vector<4x256xi32>
    %c0_i32_15 = arith.constant 0 : i32
    %53 = vector.broadcast %c0_i32_15 : i32 to vector<4x256xi32>
    %54 = arith.cmpi sge, %52, %53 : vector<4x256xi32>
    %c1_i32_16 = arith.constant 1 : i32
    %55 = vector.broadcast %c1_i32_16 : i32 to vector<4x256xi32>
    %56 = arith.addi %1, %55 : vector<4x256xi32>
    %c256_i32_17 = arith.constant 256 : i32
    %57 = vector.broadcast %c256_i32_17 : i32 to vector<4x256xi32>
    %58 = arith.cmpi slt, %56, %57 : vector<4x256xi32>
    %59 = arith.andi %54, %58 : vector<4x256xi1>
    %cst_18 = arith.constant 0.000000e+00 : f32
    %60 = vector.broadcast %cst_18 : f32 to vector<4x256xf32>
    %61 = arith.select %59, %50, %60 : vector<4x256xi1>, vector<4x256xf32>
    %c254_i32 = arith.constant 254 : i32
    %62 = tpu.dynamic_rotate %0 by %c254_i32 dim 1 : vector<4x256xf32>, i32 -> vector<4x256xf32>
    %c2_i32_19 = arith.constant 2 : i32
    %63 = vector.broadcast %c2_i32_19 : i32 to vector<4x256xi32>
    %64 = arith.addi %1, %63 : vector<4x256xi32>
    %c0_i32_20 = arith.constant 0 : i32
    %65 = vector.broadcast %c0_i32_20 : i32 to vector<4x256xi32>
    %66 = arith.cmpi sge, %64, %65 : vector<4x256xi32>
    %c2_i32_21 = arith.constant 2 : i32
    %67 = vector.broadcast %c2_i32_21 : i32 to vector<4x256xi32>
    %68 = arith.addi %1, %67 : vector<4x256xi32>
    %c256_i32_22 = arith.constant 256 : i32
    %69 = vector.broadcast %c256_i32_22 : i32 to vector<4x256xi32>
    %70 = arith.cmpi slt, %68, %69 : vector<4x256xi32>
    %71 = arith.andi %66, %70 : vector<4x256xi1>
    %cst_23 = arith.constant 0.000000e+00 : f32
    %72 = vector.broadcast %cst_23 : f32 to vector<4x256xf32>
    %73 = arith.select %71, %62, %72 : vector<4x256xi1>, vector<4x256xf32>
    %c253_i32 = arith.constant 253 : i32
    %74 = tpu.dynamic_rotate %0 by %c253_i32 dim 1 : vector<4x256xf32>, i32 -> vector<4x256xf32>
    %c3_i32_24 = arith.constant 3 : i32
    %75 = vector.broadcast %c3_i32_24 : i32 to vector<4x256xi32>
    %76 = arith.addi %1, %75 : vector<4x256xi32>
    %c0_i32_25 = arith.constant 0 : i32
    %77 = vector.broadcast %c0_i32_25 : i32 to vector<4x256xi32>
    %78 = arith.cmpi sge, %76, %77 : vector<4x256xi32>
    %c3_i32_26 = arith.constant 3 : i32
    %79 = vector.broadcast %c3_i32_26 : i32 to vector<4x256xi32>
    %80 = arith.addi %1, %79 : vector<4x256xi32>
    %c256_i32_27 = arith.constant 256 : i32
    %81 = vector.broadcast %c256_i32_27 : i32 to vector<4x256xi32>
    %82 = arith.cmpi slt, %80, %81 : vector<4x256xi32>
    %83 = arith.andi %78, %82 : vector<4x256xi1>
    %cst_28 = arith.constant 0.000000e+00 : f32
    %84 = vector.broadcast %cst_28 : f32 to vector<4x256xf32>
    %85 = arith.select %83, %74, %84 : vector<4x256xi1>, vector<4x256xf32>
    %c252_i32 = arith.constant 252 : i32
    %86 = tpu.dynamic_rotate %0 by %c252_i32 dim 1 : vector<4x256xf32>, i32 -> vector<4x256xf32>
    %c4_i32_29 = arith.constant 4 : i32
    %87 = vector.broadcast %c4_i32_29 : i32 to vector<4x256xi32>
    %88 = arith.addi %1, %87 : vector<4x256xi32>
    %c0_i32_30 = arith.constant 0 : i32
    %89 = vector.broadcast %c0_i32_30 : i32 to vector<4x256xi32>
    %90 = arith.cmpi sge, %88, %89 : vector<4x256xi32>
    %c4_i32_31 = arith.constant 4 : i32
    %91 = vector.broadcast %c4_i32_31 : i32 to vector<4x256xi32>
    %92 = arith.addi %1, %91 : vector<4x256xi32>
    %c256_i32_32 = arith.constant 256 : i32
    %93 = vector.broadcast %c256_i32_32 : i32 to vector<4x256xi32>
    %94 = arith.cmpi slt, %92, %93 : vector<4x256xi32>
    %95 = arith.andi %90, %94 : vector<4x256xi1>
    %cst_33 = arith.constant 0.000000e+00 : f32
    %96 = vector.broadcast %cst_33 : f32 to vector<4x256xf32>
    %97 = arith.select %95, %86, %96 : vector<4x256xi1>, vector<4x256xf32>
    %c0_34 = arith.constant 0 : index
    %c0_35 = arith.constant 0 : index
    %98 = memref.load %arg1[%c0_34, %c0_35] : memref<16x9xf32, #tpu.memory_space<smem>>
    %99 = vector.broadcast %98 : f32 to vector<4x256xf32>
    %100 = arith.mulf %13, %99 : vector<4x256xf32>
    %c0_36 = arith.constant 0 : index
    %c1 = arith.constant 1 : index
    %101 = memref.load %arg1[%c0_36, %c1] : memref<16x9xf32, #tpu.memory_space<smem>>
    %102 = vector.broadcast %101 : f32 to vector<4x256xf32>
    %103 = arith.mulf %25, %102 : vector<4x256xf32>
    %104 = arith.addf %100, %103 : vector<4x256xf32>
    %c0_37 = arith.constant 0 : index
    %c2 = arith.constant 2 : index
    %105 = memref.load %arg1[%c0_37, %c2] : memref<16x9xf32, #tpu.memory_space<smem>>
    %106 = vector.broadcast %105 : f32 to vector<4x256xf32>
    %107 = arith.mulf %37, %106 : vector<4x256xf32>
    %108 = arith.addf %104, %107 : vector<4x256xf32>
    %c0_38 = arith.constant 0 : index
    %c3 = arith.constant 3 : index
    %109 = memref.load %arg1[%c0_38, %c3] : memref<16x9xf32, #tpu.memory_space<smem>>
    %110 = vector.broadcast %109 : f32 to vector<4x256xf32>
    %111 = arith.mulf %49, %110 : vector<4x256xf32>
    %112 = arith.addf %108, %111 : vector<4x256xf32>
    %c0_39 = arith.constant 0 : index
    %c4 = arith.constant 4 : index
    %113 = memref.load %arg1[%c0_39, %c4] : memref<16x9xf32, #tpu.memory_space<smem>>
    %114 = vector.broadcast %113 : f32 to vector<4x256xf32>
    %115 = arith.mulf %0, %114 : vector<4x256xf32>
    %116 = arith.addf %112, %115 : vector<4x256xf32>
    %c0_40 = arith.constant 0 : index
    %c5 = arith.constant 5 : index
    %117 = memref.load %arg1[%c0_40, %c5] : memref<16x9xf32, #tpu.memory_space<smem>>
    %118 = vector.broadcast %117 : f32 to vector<4x256xf32>
    %119 = arith.mulf %61, %118 : vector<4x256xf32>
    %120 = arith.addf %116, %119 : vector<4x256xf32>
    %c0_41 = arith.constant 0 : index
    %c6 = arith.constant 6 : index
    %121 = memref.load %arg1[%c0_41, %c6] : memref<16x9xf32, #tpu.memory_space<smem>>
    %122 = vector.broadcast %121 : f32 to vector<4x256xf32>
    %123 = arith.mulf %73, %122 : vector<4x256xf32>
    %124 = arith.addf %120, %123 : vector<4x256xf32>
    %c0_42 = arith.constant 0 : index
    %c7 = arith.constant 7 : index
    %125 = memref.load %arg1[%c0_42, %c7] : memref<16x9xf32, #tpu.memory_space<smem>>
    %126 = vector.broadcast %125 : f32 to vector<4x256xf32>
    %127 = arith.mulf %85, %126 : vector<4x256xf32>
    %128 = arith.addf %124, %127 : vector<4x256xf32>
    %c0_43 = arith.constant 0 : index
    %c8 = arith.constant 8 : index
    %129 = memref.load %arg1[%c0_43, %c8] : memref<16x9xf32, #tpu.memory_space<smem>>
    %130 = vector.broadcast %129 : f32 to vector<4x256xf32>
    %131 = arith.mulf %97, %130 : vector<4x256xf32>
    %132 = arith.addf %128, %131 : vector<4x256xf32>
    %c0_44 = arith.constant 0 : index
    %c0_45 = arith.constant 0 : index
    %c0_46 = arith.constant 0 : index
    %133 = vector.load %arg3[%c0_44, %c0_45, %c0_46] : memref<4x16x256xf32, #tpu.memory_space<vmem>>, vector<4x1x256xf32>
    %134 = vector.shape_cast %133 : vector<4x1x256xf32> to vector<4x256xf32>
    %135 = vector.shape_cast %132 : vector<4x256xf32> to vector<4x1x256xf32>
    tpu.vector_store %arg3[%c0_44, %c0_45, %c0_46], %135 {strides = array<i32>} : memref<4x16x256xf32, #tpu.memory_space<vmem>>, vector<4x1x256xf32>,
    %c1_47 = arith.constant 1 : index
    %c0_48 = arith.constant 0 : index
    %136 = memref.load %arg1[%c1_47, %c0_48] : memref<16x9xf32, #tpu.memory_space<smem>>
    %137 = vector.broadcast %136 : f32 to vector<4x256xf32>
    %138 = arith.mulf %13, %137 : vector<4x256xf32>
    %c1_49 = arith.constant 1 : index
    %c1_50 = arith.constant 1 : index
    %139 = memref.load %arg1[%c1_49, %c1_50] : memref<16x9xf32, #tpu.memory_space<smem>>
    %140 = vector.broadcast %139 : f32 to vector<4x256xf32>
    %141 = arith.mulf %25, %140 : vector<4x256xf32>
    %142 = arith.addf %138, %141 : vector<4x256xf32>
    %c1_51 = arith.constant 1 : index
    %c2_52 = arith.constant 2 : index
    %143 = memref.load %arg1[%c1_51, %c2_52] : memref<16x9xf32, #tpu.memory_space<smem>>
    %144 = vector.broadcast %143 : f32 to vector<4x256xf32>
    %145 = arith.mulf %37, %144 : vector<4x256xf32>
    %146 = arith.addf %142, %145 : vector<4x256xf32>
    %c1_53 = arith.constant 1 : index
    %c3_54 = arith.constant 3 : index
    %147 = memref.load %arg1[%c1_53, %c3_54] : memref<16x9xf32, #tpu.memory_space<smem>>
    %148 = vector.broadcast %147 : f32 to vector<4x256xf32>
    %149 = arith.mulf %49, %148 : vector<4x256xf32>
    %150 = arith.addf %146, %149 : vector<4x256xf32>
    %c1_55 = arith.constant 1 : index
    %c4_56 = arith.constant 4 : index
    %151 = memref.load %arg1[%c1_55, %c4_56] : memref<16x9xf32, #tpu.memory_space<smem>>
    %152 = vector.broadcast %151 : f32 to vector<4x256xf32>
    %153 = arith.mulf %0, %152 : vector<4x256xf32>
    %154 = arith.addf %150, %153 : vector<4x256xf32>
    %c1_57 = arith.constant 1 : index
    %c5_58 = arith.constant 5 : index
    %155 = memref.load %arg1[%c1_57, %c5_58] : memref<16x9xf32, #tpu.memory_space<smem>>
    %156 = vector.broadcast %155 : f32 to vector<4x256xf32>
    %157 = arith.mulf %61, %156 : vector<4x256xf32>
    %158 = arith.addf %154, %157 : vector<4x256xf32>
    %c1_59 = arith.constant 1 : index
    %c6_60 = arith.constant 6 : index
    %159 = memref.load %arg1[%c1_59, %c6_60] : memref<16x9xf32, #tpu.memory_space<smem>>
    %160 = vector.broadcast %159 : f32 to vector<4x256xf32>
    %161 = arith.mulf %73, %160 : vector<4x256xf32>
    %162 = arith.addf %158, %161 : vector<4x256xf32>
    %c1_61 = arith.constant 1 : index
    %c7_62 = arith.constant 7 : index
    %163 = memref.load %arg1[%c1_61, %c7_62] : memref<16x9xf32, #tpu.memory_space<smem>>
    %164 = vector.broadcast %163 : f32 to vector<4x256xf32>
    %165 = arith.mulf %85, %164 : vector<4x256xf32>
    %166 = arith.addf %162, %165 : vector<4x256xf32>
    %c1_63 = arith.constant 1 : index
    %c8_64 = arith.constant 8 : index
    %167 = memref.load %arg1[%c1_63, %c8_64] : memref<16x9xf32, #tpu.memory_space<smem>>
    %168 = vector.broadcast %167 : f32 to vector<4x256xf32>
    %169 = arith.mulf %97, %168 : vector<4x256xf32>
    %170 = arith.addf %166, %169 : vector<4x256xf32>
    %c0_65 = arith.constant 0 : index
    %c1_66 = arith.constant 1 : index
    %c0_67 = arith.constant 0 : index
    %171 = vector.load %arg3[%c0_65, %c1_66, %c0_67] : memref<4x16x256xf32, #tpu.memory_space<vmem>>, vector<4x1x256xf32>
    %172 = vector.shape_cast %171 : vector<4x1x256xf32> to vector<4x256xf32>
    %173 = vector.shape_cast %170 : vector<4x256xf32> to vector<4x1x256xf32>
    tpu.vector_store %arg3[%c0_65, %c1_66, %c0_67], %173 {strides = array<i32>} : memref<4x16x256xf32, #tpu.memory_space<vmem>>, vector<4x1x256xf32>,
    %c2_68 = arith.constant 2 : index
    %c0_69 = arith.constant 0 : index
    %174 = memref.load %arg1[%c2_68, %c0_69] : memref<16x9xf32, #tpu.memory_space<smem>>
    %175 = vector.broadcast %174 : f32 to vector<4x256xf32>
    %176 = arith.mulf %13, %175 : vector<4x256xf32>
    %c2_70 = arith.constant 2 : index
    %c1_71 = arith.constant 1 : index
    %177 = memref.load %arg1[%c2_70, %c1_71] : memref<16x9xf32, #tpu.memory_space<smem>>
    %178 = vector.broadcast %177 : f32 to vector<4x256xf32>
    %179 = arith.mulf %25, %178 : vector<4x256xf32>
    %180 = arith.addf %176, %179 : vector<4x256xf32>
    %c2_72 = arith.constant 2 : index
    %c2_73 = arith.constant 2 : index
    %181 = memref.load %arg1[%c2_72, %c2_73] : memref<16x9xf32, #tpu.memory_space<smem>>
    %182 = vector.broadcast %181 : f32 to vector<4x256xf32>
    %183 = arith.mulf %37, %182 : vector<4x256xf32>
    %184 = arith.addf %180, %183 : vector<4x256xf32>
    %c2_74 = arith.constant 2 : index
    %c3_75 = arith.constant 3 : index
    %185 = memref.load %arg1[%c2_74, %c3_75] : memref<16x9xf32, #tpu.memory_space<smem>>
    %186 = vector.broadcast %185 : f32 to vector<4x256xf32>
    %187 = arith.mulf %49, %186 : vector<4x256xf32>
    %188 = arith.addf %184, %187 : vector<4x256xf32>
    %c2_76 = arith.constant 2 : index
    %c4_77 = arith.constant 4 : index
    %189 = memref.load %arg1[%c2_76, %c4_77] : memref<16x9xf32, #tpu.memory_space<smem>>
    %190 = vector.broadcast %189 : f32 to vector<4x256xf32>
    %191 = arith.mulf %0, %190 : vector<4x256xf32>
    %192 = arith.addf %188, %191 : vector<4x256xf32>
    %c2_78 = arith.constant 2 : index
    %c5_79 = arith.constant 5 : index
    %193 = memref.load %arg1[%c2_78, %c5_79] : memref<16x9xf32, #tpu.memory_space<smem>>
    %194 = vector.broadcast %193 : f32 to vector<4x256xf32>
    %195 = arith.mulf %61, %194 : vector<4x256xf32>
    %196 = arith.addf %192, %195 : vector<4x256xf32>
    %c2_80 = arith.constant 2 : index
    %c6_81 = arith.constant 6 : index
    %197 = memref.load %arg1[%c2_80, %c6_81] : memref<16x9xf32, #tpu.memory_space<smem>>
    %198 = vector.broadcast %197 : f32 to vector<4x256xf32>
    %199 = arith.mulf %73, %198 : vector<4x256xf32>
    %200 = arith.addf %196, %199 : vector<4x256xf32>
    %c2_82 = arith.constant 2 : index
    %c7_83 = arith.constant 7 : index
    %201 = memref.load %arg1[%c2_82, %c7_83] : memref<16x9xf32, #tpu.memory_space<smem>>
    %202 = vector.broadcast %201 : f32 to vector<4x256xf32>
    %203 = arith.mulf %85, %202 : vector<4x256xf32>
    %204 = arith.addf %200, %203 : vector<4x256xf32>
    %c2_84 = arith.constant 2 : index
    %c8_85 = arith.constant 8 : index
    %205 = memref.load %arg1[%c2_84, %c8_85] : memref<16x9xf32, #tpu.memory_space<smem>>
    %206 = vector.broadcast %205 : f32 to vector<4x256xf32>
    %207 = arith.mulf %97, %206 : vector<4x256xf32>
    %208 = arith.addf %204, %207 : vector<4x256xf32>
    %c0_86 = arith.constant 0 : index
    %c2_87 = arith.constant 2 : index
    %c0_88 = arith.constant 0 : index
    %209 = vector.load %arg3[%c0_86, %c2_87, %c0_88] : memref<4x16x256xf32, #tpu.memory_space<vmem>>, vector<4x1x256xf32>
    %210 = vector.shape_cast %209 : vector<4x1x256xf32> to vector<4x256xf32>
    %211 = vector.shape_cast %208 : vector<4x256xf32> to vector<4x1x256xf32>
    tpu.vector_store %arg3[%c0_86, %c2_87, %c0_88], %211 {strides = array<i32>} : memref<4x16x256xf32, #tpu.memory_space<vmem>>, vector<4x1x256xf32>,
    %c3_89 = arith.constant 3 : index
    %c0_90 = arith.constant 0 : index
    %212 = memref.load %arg1[%c3_89, %c0_90] : memref<16x9xf32, #tpu.memory_space<smem>>
    %213 = vector.broadcast %212 : f32 to vector<4x256xf32>
    %214 = arith.mulf %13, %213 : vector<4x256xf32>
    %c3_91 = arith.constant 3 : index
    %c1_92 = arith.constant 1 : index
    %215 = memref.load %arg1[%c3_91, %c1_92] : memref<16x9xf32, #tpu.memory_space<smem>>
    %216 = vector.broadcast %215 : f32 to vector<4x256xf32>
    %217 = arith.mulf %25, %216 : vector<4x256xf32>
    %218 = arith.addf %214, %217 : vector<4x256xf32>
    %c3_93 = arith.constant 3 : index
    %c2_94 = arith.constant 2 : index
    %219 = memref.load %arg1[%c3_93, %c2_94] : memref<16x9xf32, #tpu.memory_space<smem>>
    %220 = vector.broadcast %219 : f32 to vector<4x256xf32>
    %221 = arith.mulf %37, %220 : vector<4x256xf32>
    %222 = arith.addf %218, %221 : vector<4x256xf32>
    %c3_95 = arith.constant 3 : index
    %c3_96 = arith.constant 3 : index
    %223 = memref.load %arg1[%c3_95, %c3_96] : memref<16x9xf32, #tpu.memory_space<smem>>
    %224 = vector.broadcast %223 : f32 to vector<4x256xf32>
    %225 = arith.mulf %49, %224 : vector<4x256xf32>
    %226 = arith.addf %222, %225 : vector<4x256xf32>
    %c3_97 = arith.constant 3 : index
    %c4_98 = arith.constant 4 : index
    %227 = memref.load %arg1[%c3_97, %c4_98] : memref<16x9xf32, #tpu.memory_space<smem>>
    %228 = vector.broadcast %227 : f32 to vector<4x256xf32>
    %229 = arith.mulf %0, %228 : vector<4x256xf32>
    %230 = arith.addf %226, %229 : vector<4x256xf32>
    %c3_99 = arith.constant 3 : index
    %c5_100 = arith.constant 5 : index
    %231 = memref.load %arg1[%c3_99, %c5_100] : memref<16x9xf32, #tpu.memory_space<smem>>
    %232 = vector.broadcast %231 : f32 to vector<4x256xf32>
    %233 = arith.mulf %61, %232 : vector<4x256xf32>
    %234 = arith.addf %230, %233 : vector<4x256xf32>
    %c3_101 = arith.constant 3 : index
    %c6_102 = arith.constant 6 : index
    %235 = memref.load %arg1[%c3_101, %c6_102] : memref<16x9xf32, #tpu.memory_space<smem>>
    %236 = vector.broadcast %235 : f32 to vector<4x256xf32>
    %237 = arith.mulf %73, %236 : vector<4x256xf32>
    %238 = arith.addf %234, %237 : vector<4x256xf32>
    %c3_103 = arith.constant 3 : index
    %c7_104 = arith.constant 7 : index
    %239 = memref.load %arg1[%c3_103, %c7_104] : memref<16x9xf32, #tpu.memory_space<smem>>
    %240 = vector.broadcast %239 : f32 to vector<4x256xf32>
    %241 = arith.mulf %85, %240 : vector<4x256xf32>
    %242 = arith.addf %238, %241 : vector<4x256xf32>
    %c3_105 = arith.constant 3 : index
    %c8_106 = arith.constant 8 : index
    %243 = memref.load %arg1[%c3_105, %c8_106] : memref<16x9xf32, #tpu.memory_space<smem>>
    %244 = vector.broadcast %243 : f32 to vector<4x256xf32>
    %245 = arith.mulf %97, %244 : vector<4x256xf32>
    %246 = arith.addf %242, %245 : vector<4x256xf32>
    %c0_107 = arith.constant 0 : index
    %c3_108 = arith.constant 3 : index
    %c0_109 = arith.constant 0 : index
    %247 = vector.load %arg3[%c0_107, %c3_108, %c0_109] : memref<4x16x256xf32, #tpu.memory_space<vmem>>, vector<4x1x256xf32>
    %248 = vector.shape_cast %247 : vector<4x1x256xf32> to vector<4x256xf32>
    %249 = vector.shape_cast %246 : vector<4x256xf32> to vector<4x1x256xf32>
    tpu.vector_store %arg3[%c0_107, %c3_108, %c0_109], %249 {strides = array<i32>} : memref<4x16x256xf32, #tpu.memory_space<vmem>>, vector<4x1x256xf32>,
    %c4_110 = arith.constant 4 : index
    %c0_111 = arith.constant 0 : index
    %250 = memref.load %arg1[%c4_110, %c0_111] : memref<16x9xf32, #tpu.memory_space<smem>>
    %251 = vector.broadcast %250 : f32 to vector<4x256xf32>
    %252 = arith.mulf %13, %251 : vector<4x256xf32>
    %c4_112 = arith.constant 4 : index
    %c1_113 = arith.constant 1 : index
    %253 = memref.load %arg1[%c4_112, %c1_113] : memref<16x9xf32, #tpu.memory_space<smem>>
    %254 = vector.broadcast %253 : f32 to vector<4x256xf32>
    %255 = arith.mulf %25, %254 : vector<4x256xf32>
    %256 = arith.addf %252, %255 : vector<4x256xf32>
    %c4_114 = arith.constant 4 : index
    %c2_115 = arith.constant 2 : index
    %257 = memref.load %arg1[%c4_114, %c2_115] : memref<16x9xf32, #tpu.memory_space<smem>>
    %258 = vector.broadcast %257 : f32 to vector<4x256xf32>
    %259 = arith.mulf %37, %258 : vector<4x256xf32>
    %260 = arith.addf %256, %259 : vector<4x256xf32>
    %c4_116 = arith.constant 4 : index
    %c3_117 = arith.constant 3 : index
    %261 = memref.load %arg1[%c4_116, %c3_117] : memref<16x9xf32, #tpu.memory_space<smem>>
    %262 = vector.broadcast %261 : f32 to vector<4x256xf32>
    %263 = arith.mulf %49, %262 : vector<4x256xf32>
    %264 = arith.addf %260, %263 : vector<4x256xf32>
    %c4_118 = arith.constant 4 : index
    %c4_119 = arith.constant 4 : index
    %265 = memref.load %arg1[%c4_118, %c4_119] : memref<16x9xf32, #tpu.memory_space<smem>>
    %266 = vector.broadcast %265 : f32 to vector<4x256xf32>
    %267 = arith.mulf %0, %266 : vector<4x256xf32>
    %268 = arith.addf %264, %267 : vector<4x256xf32>
    %c4_120 = arith.constant 4 : index
    %c5_121 = arith.constant 5 : index
    %269 = memref.load %arg1[%c4_120, %c5_121] : memref<16x9xf32, #tpu.memory_space<smem>>
    %270 = vector.broadcast %269 : f32 to vector<4x256xf32>
    %271 = arith.mulf %61, %270 : vector<4x256xf32>
    %272 = arith.addf %268, %271 : vector<4x256xf32>
    %c4_122 = arith.constant 4 : index
    %c6_123 = arith.constant 6 : index
    %273 = memref.load %arg1[%c4_122, %c6_123] : memref<16x9xf32, #tpu.memory_space<smem>>
    %274 = vector.broadcast %273 : f32 to vector<4x256xf32>
    %275 = arith.mulf %73, %274 : vector<4x256xf32>
    %276 = arith.addf %272, %275 : vector<4x256xf32>
    %c4_124 = arith.constant 4 : index
    %c7_125 = arith.constant 7 : index
    %277 = memref.load %arg1[%c4_124, %c7_125] : memref<16x9xf32, #tpu.memory_space<smem>>
    %278 = vector.broadcast %277 : f32 to vector<4x256xf32>
    %279 = arith.mulf %85, %278 : vector<4x256xf32>
    %280 = arith.addf %276, %279 : vector<4x256xf32>
    %c4_126 = arith.constant 4 : index
    %c8_127 = arith.constant 8 : index
    %281 = memref.load %arg1[%c4_126, %c8_127] : memref<16x9xf32, #tpu.memory_space<smem>>
    %282 = vector.broadcast %281 : f32 to vector<4x256xf32>
    %283 = arith.mulf %97, %282 : vector<4x256xf32>
    %284 = arith.addf %280, %283 : vector<4x256xf32>
    %c0_128 = arith.constant 0 : index
    %c4_129 = arith.constant 4 : index
    %c0_130 = arith.constant 0 : index
    %285 = vector.load %arg3[%c0_128, %c4_129, %c0_130] : memref<4x16x256xf32, #tpu.memory_space<vmem>>, vector<4x1x256xf32>
    %286 = vector.shape_cast %285 : vector<4x1x256xf32> to vector<4x256xf32>
    %287 = vector.shape_cast %284 : vector<4x256xf32> to vector<4x1x256xf32>
    tpu.vector_store %arg3[%c0_128, %c4_129, %c0_130], %287 {strides = array<i32>} : memref<4x16x256xf32, #tpu.memory_space<vmem>>, vector<4x1x256xf32>,
    %c5_131 = arith.constant 5 : index
    %c0_132 = arith.constant 0 : index
    %288 = memref.load %arg1[%c5_131, %c0_132] : memref<16x9xf32, #tpu.memory_space<smem>>
    %289 = vector.broadcast %288 : f32 to vector<4x256xf32>
    %290 = arith.mulf %13, %289 : vector<4x256xf32>
    %c5_133 = arith.constant 5 : index
    %c1_134 = arith.constant 1 : index
    %291 = memref.load %arg1[%c5_133, %c1_134] : memref<16x9xf32, #tpu.memory_space<smem>>
    %292 = vector.broadcast %291 : f32 to vector<4x256xf32>
    %293 = arith.mulf %25, %292 : vector<4x256xf32>
    %294 = arith.addf %290, %293 : vector<4x256xf32>
    %c5_135 = arith.constant 5 : index
    %c2_136 = arith.constant 2 : index
    %295 = memref.load %arg1[%c5_135, %c2_136] : memref<16x9xf32, #tpu.memory_space<smem>>
    %296 = vector.broadcast %295 : f32 to vector<4x256xf32>
    %297 = arith.mulf %37, %296 : vector<4x256xf32>
    %298 = arith.addf %294, %297 : vector<4x256xf32>
    %c5_137 = arith.constant 5 : index
    %c3_138 = arith.constant 3 : index
    %299 = memref.load %arg1[%c5_137, %c3_138] : memref<16x9xf32, #tpu.memory_space<smem>>
    %300 = vector.broadcast %299 : f32 to vector<4x256xf32>
    %301 = arith.mulf %49, %300 : vector<4x256xf32>
    %302 = arith.addf %298, %301 : vector<4x256xf32>
    %c5_139 = arith.constant 5 : index
    %c4_140 = arith.constant 4 : index
    %303 = memref.load %arg1[%c5_139, %c4_140] : memref<16x9xf32, #tpu.memory_space<smem>>
    %304 = vector.broadcast %303 : f32 to vector<4x256xf32>
    %305 = arith.mulf %0, %304 : vector<4x256xf32>
    %306 = arith.addf %302, %305 : vector<4x256xf32>
    %c5_141 = arith.constant 5 : index
    %c5_142 = arith.constant 5 : index
    %307 = memref.load %arg1[%c5_141, %c5_142] : memref<16x9xf32, #tpu.memory_space<smem>>
    %308 = vector.broadcast %307 : f32 to vector<4x256xf32>
    %309 = arith.mulf %61, %308 : vector<4x256xf32>
    %310 = arith.addf %306, %309 : vector<4x256xf32>
    %c5_143 = arith.constant 5 : index
    %c6_144 = arith.constant 6 : index
    %311 = memref.load %arg1[%c5_143, %c6_144] : memref<16x9xf32, #tpu.memory_space<smem>>
    %312 = vector.broadcast %311 : f32 to vector<4x256xf32>
    %313 = arith.mulf %73, %312 : vector<4x256xf32>
    %314 = arith.addf %310, %313 : vector<4x256xf32>
    %c5_145 = arith.constant 5 : index
    %c7_146 = arith.constant 7 : index
    %315 = memref.load %arg1[%c5_145, %c7_146] : memref<16x9xf32, #tpu.memory_space<smem>>
    %316 = vector.broadcast %315 : f32 to vector<4x256xf32>
    %317 = arith.mulf %85, %316 : vector<4x256xf32>
    %318 = arith.addf %314, %317 : vector<4x256xf32>
    %c5_147 = arith.constant 5 : index
    %c8_148 = arith.constant 8 : index
    %319 = memref.load %arg1[%c5_147, %c8_148] : memref<16x9xf32, #tpu.memory_space<smem>>
    %320 = vector.broadcast %319 : f32 to vector<4x256xf32>
    %321 = arith.mulf %97, %320 : vector<4x256xf32>
    %322 = arith.addf %318, %321 : vector<4x256xf32>
    %c0_149 = arith.constant 0 : index
    %c5_150 = arith.constant 5 : index
    %c0_151 = arith.constant 0 : index
    %323 = vector.load %arg3[%c0_149, %c5_150, %c0_151] : memref<4x16x256xf32, #tpu.memory_space<vmem>>, vector<4x1x256xf32>
    %324 = vector.shape_cast %323 : vector<4x1x256xf32> to vector<4x256xf32>
    %325 = vector.shape_cast %322 : vector<4x256xf32> to vector<4x1x256xf32>
    tpu.vector_store %arg3[%c0_149, %c5_150, %c0_151], %325 {strides = array<i32>} : memref<4x16x256xf32, #tpu.memory_space<vmem>>, vector<4x1x256xf32>,
    %c6_152 = arith.constant 6 : index
    %c0_153 = arith.constant 0 : index
    %326 = memref.load %arg1[%c6_152, %c0_153] : memref<16x9xf32, #tpu.memory_space<smem>>
    %327 = vector.broadcast %326 : f32 to vector<4x256xf32>
    %328 = arith.mulf %13, %327 : vector<4x256xf32>
    %c6_154 = arith.constant 6 : index
    %c1_155 = arith.constant 1 : index
    %329 = memref.load %arg1[%c6_154, %c1_155] : memref<16x9xf32, #tpu.memory_space<smem>>
    %330 = vector.broadcast %329 : f32 to vector<4x256xf32>
    %331 = arith.mulf %25, %330 : vector<4x256xf32>
    %332 = arith.addf %328, %331 : vector<4x256xf32>
    %c6_156 = arith.constant 6 : index
    %c2_157 = arith.constant 2 : index
    %333 = memref.load %arg1[%c6_156, %c2_157] : memref<16x9xf32, #tpu.memory_space<smem>>
    %334 = vector.broadcast %333 : f32 to vector<4x256xf32>
    %335 = arith.mulf %37, %334 : vector<4x256xf32>
    %336 = arith.addf %332, %335 : vector<4x256xf32>
    %c6_158 = arith.constant 6 : index
    %c3_159 = arith.constant 3 : index
    %337 = memref.load %arg1[%c6_158, %c3_159] : memref<16x9xf32, #tpu.memory_space<smem>>
    %338 = vector.broadcast %337 : f32 to vector<4x256xf32>
    %339 = arith.mulf %49, %338 : vector<4x256xf32>
    %340 = arith.addf %336, %339 : vector<4x256xf32>
    %c6_160 = arith.constant 6 : index
    %c4_161 = arith.constant 4 : index
    %341 = memref.load %arg1[%c6_160, %c4_161] : memref<16x9xf32, #tpu.memory_space<smem>>
    %342 = vector.broadcast %341 : f32 to vector<4x256xf32>
    %343 = arith.mulf %0, %342 : vector<4x256xf32>
    %344 = arith.addf %340, %343 : vector<4x256xf32>
    %c6_162 = arith.constant 6 : index
    %c5_163 = arith.constant 5 : index
    %345 = memref.load %arg1[%c6_162, %c5_163] : memref<16x9xf32, #tpu.memory_space<smem>>
    %346 = vector.broadcast %345 : f32 to vector<4x256xf32>
    %347 = arith.mulf %61, %346 : vector<4x256xf32>
    %348 = arith.addf %344, %347 : vector<4x256xf32>
    %c6_164 = arith.constant 6 : index
    %c6_165 = arith.constant 6 : index
    %349 = memref.load %arg1[%c6_164, %c6_165] : memref<16x9xf32, #tpu.memory_space<smem>>
    %350 = vector.broadcast %349 : f32 to vector<4x256xf32>
    %351 = arith.mulf %73, %350 : vector<4x256xf32>
    %352 = arith.addf %348, %351 : vector<4x256xf32>
    %c6_166 = arith.constant 6 : index
    %c7_167 = arith.constant 7 : index
    %353 = memref.load %arg1[%c6_166, %c7_167] : memref<16x9xf32, #tpu.memory_space<smem>>
    %354 = vector.broadcast %353 : f32 to vector<4x256xf32>
    %355 = arith.mulf %85, %354 : vector<4x256xf32>
    %356 = arith.addf %352, %355 : vector<4x256xf32>
    %c6_168 = arith.constant 6 : index
    %c8_169 = arith.constant 8 : index
    %357 = memref.load %arg1[%c6_168, %c8_169] : memref<16x9xf32, #tpu.memory_space<smem>>
    %358 = vector.broadcast %357 : f32 to vector<4x256xf32>
    %359 = arith.mulf %97, %358 : vector<4x256xf32>
    %360 = arith.addf %356, %359 : vector<4x256xf32>
    %c0_170 = arith.constant 0 : index
    %c6_171 = arith.constant 6 : index
    %c0_172 = arith.constant 0 : index
    %361 = vector.load %arg3[%c0_170, %c6_171, %c0_172] : memref<4x16x256xf32, #tpu.memory_space<vmem>>, vector<4x1x256xf32>
    %362 = vector.shape_cast %361 : vector<4x1x256xf32> to vector<4x256xf32>
    %363 = vector.shape_cast %360 : vector<4x256xf32> to vector<4x1x256xf32>
    tpu.vector_store %arg3[%c0_170, %c6_171, %c0_172], %363 {strides = array<i32>} : memref<4x16x256xf32, #tpu.memory_space<vmem>>, vector<4x1x256xf32>,
    %c7_173 = arith.constant 7 : index
    %c0_174 = arith.constant 0 : index
    %364 = memref.load %arg1[%c7_173, %c0_174] : memref<16x9xf32, #tpu.memory_space<smem>>
    %365 = vector.broadcast %364 : f32 to vector<4x256xf32>
    %366 = arith.mulf %13, %365 : vector<4x256xf32>
    %c7_175 = arith.constant 7 : index
    %c1_176 = arith.constant 1 : index
    %367 = memref.load %arg1[%c7_175, %c1_176] : memref<16x9xf32, #tpu.memory_space<smem>>
    %368 = vector.broadcast %367 : f32 to vector<4x256xf32>
    %369 = arith.mulf %25, %368 : vector<4x256xf32>
    %370 = arith.addf %366, %369 : vector<4x256xf32>
    %c7_177 = arith.constant 7 : index
    %c2_178 = arith.constant 2 : index
    %371 = memref.load %arg1[%c7_177, %c2_178] : memref<16x9xf32, #tpu.memory_space<smem>>
    %372 = vector.broadcast %371 : f32 to vector<4x256xf32>
    %373 = arith.mulf %37, %372 : vector<4x256xf32>
    %374 = arith.addf %370, %373 : vector<4x256xf32>
    %c7_179 = arith.constant 7 : index
    %c3_180 = arith.constant 3 : index
    %375 = memref.load %arg1[%c7_179, %c3_180] : memref<16x9xf32, #tpu.memory_space<smem>>
    %376 = vector.broadcast %375 : f32 to vector<4x256xf32>
    %377 = arith.mulf %49, %376 : vector<4x256xf32>
    %378 = arith.addf %374, %377 : vector<4x256xf32>
    %c7_181 = arith.constant 7 : index
    %c4_182 = arith.constant 4 : index
    %379 = memref.load %arg1[%c7_181, %c4_182] : memref<16x9xf32, #tpu.memory_space<smem>>
    %380 = vector.broadcast %379 : f32 to vector<4x256xf32>
    %381 = arith.mulf %0, %380 : vector<4x256xf32>
    %382 = arith.addf %378, %381 : vector<4x256xf32>
    %c7_183 = arith.constant 7 : index
    %c5_184 = arith.constant 5 : index
    %383 = memref.load %arg1[%c7_183, %c5_184] : memref<16x9xf32, #tpu.memory_space<smem>>
    %384 = vector.broadcast %383 : f32 to vector<4x256xf32>
    %385 = arith.mulf %61, %384 : vector<4x256xf32>
    %386 = arith.addf %382, %385 : vector<4x256xf32>
    %c7_185 = arith.constant 7 : index
    %c6_186 = arith.constant 6 : index
    %387 = memref.load %arg1[%c7_185, %c6_186] : memref<16x9xf32, #tpu.memory_space<smem>>
    %388 = vector.broadcast %387 : f32 to vector<4x256xf32>
    %389 = arith.mulf %73, %388 : vector<4x256xf32>
    %390 = arith.addf %386, %389 : vector<4x256xf32>
    %c7_187 = arith.constant 7 : index
    %c7_188 = arith.constant 7 : index
    %391 = memref.load %arg1[%c7_187, %c7_188] : memref<16x9xf32, #tpu.memory_space<smem>>
    %392 = vector.broadcast %391 : f32 to vector<4x256xf32>
    %393 = arith.mulf %85, %392 : vector<4x256xf32>
    %394 = arith.addf %390, %393 : vector<4x256xf32>
    %c7_189 = arith.constant 7 : index
    %c8_190 = arith.constant 8 : index
    %395 = memref.load %arg1[%c7_189, %c8_190] : memref<16x9xf32, #tpu.memory_space<smem>>
    %396 = vector.broadcast %395 : f32 to vector<4x256xf32>
    %397 = arith.mulf %97, %396 : vector<4x256xf32>
    %398 = arith.addf %394, %397 : vector<4x256xf32>
    %c0_191 = arith.constant 0 : index
    %c7_192 = arith.constant 7 : index
    %c0_193 = arith.constant 0 : index
    %399 = vector.load %arg3[%c0_191, %c7_192, %c0_193] : memref<4x16x256xf32, #tpu.memory_space<vmem>>, vector<4x1x256xf32>
    %400 = vector.shape_cast %399 : vector<4x1x256xf32> to vector<4x256xf32>
    %401 = vector.shape_cast %398 : vector<4x256xf32> to vector<4x1x256xf32>
    tpu.vector_store %arg3[%c0_191, %c7_192, %c0_193], %401 {strides = array<i32>} : memref<4x16x256xf32, #tpu.memory_space<vmem>>, vector<4x1x256xf32>,
    %c8_194 = arith.constant 8 : index
    %c0_195 = arith.constant 0 : index
    %402 = memref.load %arg1[%c8_194, %c0_195] : memref<16x9xf32, #tpu.memory_space<smem>>
    %403 = vector.broadcast %402 : f32 to vector<4x256xf32>
    %404 = arith.mulf %13, %403 : vector<4x256xf32>
    %c8_196 = arith.constant 8 : index
    %c1_197 = arith.constant 1 : index
    %405 = memref.load %arg1[%c8_196, %c1_197] : memref<16x9xf32, #tpu.memory_space<smem>>
    %406 = vector.broadcast %405 : f32 to vector<4x256xf32>
    %407 = arith.mulf %25, %406 : vector<4x256xf32>
    %408 = arith.addf %404, %407 : vector<4x256xf32>
    %c8_198 = arith.constant 8 : index
    %c2_199 = arith.constant 2 : index
    %409 = memref.load %arg1[%c8_198, %c2_199] : memref<16x9xf32, #tpu.memory_space<smem>>
    %410 = vector.broadcast %409 : f32 to vector<4x256xf32>
    %411 = arith.mulf %37, %410 : vector<4x256xf32>
    %412 = arith.addf %408, %411 : vector<4x256xf32>
    %c8_200 = arith.constant 8 : index
    %c3_201 = arith.constant 3 : index
    %413 = memref.load %arg1[%c8_200, %c3_201] : memref<16x9xf32, #tpu.memory_space<smem>>
    %414 = vector.broadcast %413 : f32 to vector<4x256xf32>
    %415 = arith.mulf %49, %414 : vector<4x256xf32>
    %416 = arith.addf %412, %415 : vector<4x256xf32>
    %c8_202 = arith.constant 8 : index
    %c4_203 = arith.constant 4 : index
    %417 = memref.load %arg1[%c8_202, %c4_203] : memref<16x9xf32, #tpu.memory_space<smem>>
    %418 = vector.broadcast %417 : f32 to vector<4x256xf32>
    %419 = arith.mulf %0, %418 : vector<4x256xf32>
    %420 = arith.addf %416, %419 : vector<4x256xf32>
    %c8_204 = arith.constant 8 : index
    %c5_205 = arith.constant 5 : index
    %421 = memref.load %arg1[%c8_204, %c5_205] : memref<16x9xf32, #tpu.memory_space<smem>>
    %422 = vector.broadcast %421 : f32 to vector<4x256xf32>
    %423 = arith.mulf %61, %422 : vector<4x256xf32>
    %424 = arith.addf %420, %423 : vector<4x256xf32>
    %c8_206 = arith.constant 8 : index
    %c6_207 = arith.constant 6 : index
    %425 = memref.load %arg1[%c8_206, %c6_207] : memref<16x9xf32, #tpu.memory_space<smem>>
    %426 = vector.broadcast %425 : f32 to vector<4x256xf32>
    %427 = arith.mulf %73, %426 : vector<4x256xf32>
    %428 = arith.addf %424, %427 : vector<4x256xf32>
    %c8_208 = arith.constant 8 : index
    %c7_209 = arith.constant 7 : index
    %429 = memref.load %arg1[%c8_208, %c7_209] : memref<16x9xf32, #tpu.memory_space<smem>>
    %430 = vector.broadcast %429 : f32 to vector<4x256xf32>
    %431 = arith.mulf %85, %430 : vector<4x256xf32>
    %432 = arith.addf %428, %431 : vector<4x256xf32>
    %c8_210 = arith.constant 8 : index
    %c8_211 = arith.constant 8 : index
    %433 = memref.load %arg1[%c8_210, %c8_211] : memref<16x9xf32, #tpu.memory_space<smem>>
    %434 = vector.broadcast %433 : f32 to vector<4x256xf32>
    %435 = arith.mulf %97, %434 : vector<4x256xf32>
    %436 = arith.addf %432, %435 : vector<4x256xf32>
    %c0_212 = arith.constant 0 : index
    %c8_213 = arith.constant 8 : index
    %c0_214 = arith.constant 0 : index
    %437 = vector.load %arg3[%c0_212, %c8_213, %c0_214] : memref<4x16x256xf32, #tpu.memory_space<vmem>>, vector<4x1x256xf32>
    %438 = vector.shape_cast %437 : vector<4x1x256xf32> to vector<4x256xf32>
    %439 = vector.shape_cast %436 : vector<4x256xf32> to vector<4x1x256xf32>
    tpu.vector_store %arg3[%c0_212, %c8_213, %c0_214], %439 {strides = array<i32>} : memref<4x16x256xf32, #tpu.memory_space<vmem>>, vector<4x1x256xf32>,
    %c9 = arith.constant 9 : index
    %c0_215 = arith.constant 0 : index
    %440 = memref.load %arg1[%c9, %c0_215] : memref<16x9xf32, #tpu.memory_space<smem>>
    %441 = vector.broadcast %440 : f32 to vector<4x256xf32>
    %442 = arith.mulf %13, %441 : vector<4x256xf32>
    %c9_216 = arith.constant 9 : index
    %c1_217 = arith.constant 1 : index
    %443 = memref.load %arg1[%c9_216, %c1_217] : memref<16x9xf32, #tpu.memory_space<smem>>
    %444 = vector.broadcast %443 : f32 to vector<4x256xf32>
    %445 = arith.mulf %25, %444 : vector<4x256xf32>
    %446 = arith.addf %442, %445 : vector<4x256xf32>
    %c9_218 = arith.constant 9 : index
    %c2_219 = arith.constant 2 : index
    %447 = memref.load %arg1[%c9_218, %c2_219] : memref<16x9xf32, #tpu.memory_space<smem>>
    %448 = vector.broadcast %447 : f32 to vector<4x256xf32>
    %449 = arith.mulf %37, %448 : vector<4x256xf32>
    %450 = arith.addf %446, %449 : vector<4x256xf32>
    %c9_220 = arith.constant 9 : index
    %c3_221 = arith.constant 3 : index
    %451 = memref.load %arg1[%c9_220, %c3_221] : memref<16x9xf32, #tpu.memory_space<smem>>
    %452 = vector.broadcast %451 : f32 to vector<4x256xf32>
    %453 = arith.mulf %49, %452 : vector<4x256xf32>
    %454 = arith.addf %450, %453 : vector<4x256xf32>
    %c9_222 = arith.constant 9 : index
    %c4_223 = arith.constant 4 : index
    %455 = memref.load %arg1[%c9_222, %c4_223] : memref<16x9xf32, #tpu.memory_space<smem>>
    %456 = vector.broadcast %455 : f32 to vector<4x256xf32>
    %457 = arith.mulf %0, %456 : vector<4x256xf32>
    %458 = arith.addf %454, %457 : vector<4x256xf32>
    %c9_224 = arith.constant 9 : index
    %c5_225 = arith.constant 5 : index
    %459 = memref.load %arg1[%c9_224, %c5_225] : memref<16x9xf32, #tpu.memory_space<smem>>
    %460 = vector.broadcast %459 : f32 to vector<4x256xf32>
    %461 = arith.mulf %61, %460 : vector<4x256xf32>
    %462 = arith.addf %458, %461 : vector<4x256xf32>
    %c9_226 = arith.constant 9 : index
    %c6_227 = arith.constant 6 : index
    %463 = memref.load %arg1[%c9_226, %c6_227] : memref<16x9xf32, #tpu.memory_space<smem>>
    %464 = vector.broadcast %463 : f32 to vector<4x256xf32>
    %465 = arith.mulf %73, %464 : vector<4x256xf32>
    %466 = arith.addf %462, %465 : vector<4x256xf32>
    %c9_228 = arith.constant 9 : index
    %c7_229 = arith.constant 7 : index
    %467 = memref.load %arg1[%c9_228, %c7_229] : memref<16x9xf32, #tpu.memory_space<smem>>
    %468 = vector.broadcast %467 : f32 to vector<4x256xf32>
    %469 = arith.mulf %85, %468 : vector<4x256xf32>
    %470 = arith.addf %466, %469 : vector<4x256xf32>
    %c9_230 = arith.constant 9 : index
    %c8_231 = arith.constant 8 : index
    %471 = memref.load %arg1[%c9_230, %c8_231] : memref<16x9xf32, #tpu.memory_space<smem>>
    %472 = vector.broadcast %471 : f32 to vector<4x256xf32>
    %473 = arith.mulf %97, %472 : vector<4x256xf32>
    %474 = arith.addf %470, %473 : vector<4x256xf32>
    %c0_232 = arith.constant 0 : index
    %c9_233 = arith.constant 9 : index
    %c0_234 = arith.constant 0 : index
    %475 = vector.load %arg3[%c0_232, %c9_233, %c0_234] : memref<4x16x256xf32, #tpu.memory_space<vmem>>, vector<4x1x256xf32>
    %476 = vector.shape_cast %475 : vector<4x1x256xf32> to vector<4x256xf32>
    %477 = vector.shape_cast %474 : vector<4x256xf32> to vector<4x1x256xf32>
    tpu.vector_store %arg3[%c0_232, %c9_233, %c0_234], %477 {strides = array<i32>} : memref<4x16x256xf32, #tpu.memory_space<vmem>>, vector<4x1x256xf32>,
    %c10 = arith.constant 10 : index
    %c0_235 = arith.constant 0 : index
    %478 = memref.load %arg1[%c10, %c0_235] : memref<16x9xf32, #tpu.memory_space<smem>>
    %479 = vector.broadcast %478 : f32 to vector<4x256xf32>
    %480 = arith.mulf %13, %479 : vector<4x256xf32>
    %c10_236 = arith.constant 10 : index
    %c1_237 = arith.constant 1 : index
    %481 = memref.load %arg1[%c10_236, %c1_237] : memref<16x9xf32, #tpu.memory_space<smem>>
    %482 = vector.broadcast %481 : f32 to vector<4x256xf32>
    %483 = arith.mulf %25, %482 : vector<4x256xf32>
    %484 = arith.addf %480, %483 : vector<4x256xf32>
    %c10_238 = arith.constant 10 : index
    %c2_239 = arith.constant 2 : index
    %485 = memref.load %arg1[%c10_238, %c2_239] : memref<16x9xf32, #tpu.memory_space<smem>>
    %486 = vector.broadcast %485 : f32 to vector<4x256xf32>
    %487 = arith.mulf %37, %486 : vector<4x256xf32>
    %488 = arith.addf %484, %487 : vector<4x256xf32>
    %c10_240 = arith.constant 10 : index
    %c3_241 = arith.constant 3 : index
    %489 = memref.load %arg1[%c10_240, %c3_241] : memref<16x9xf32, #tpu.memory_space<smem>>
    %490 = vector.broadcast %489 : f32 to vector<4x256xf32>
    %491 = arith.mulf %49, %490 : vector<4x256xf32>
    %492 = arith.addf %488, %491 : vector<4x256xf32>
    %c10_242 = arith.constant 10 : index
    %c4_243 = arith.constant 4 : index
    %493 = memref.load %arg1[%c10_242, %c4_243] : memref<16x9xf32, #tpu.memory_space<smem>>
    %494 = vector.broadcast %493 : f32 to vector<4x256xf32>
    %495 = arith.mulf %0, %494 : vector<4x256xf32>
    %496 = arith.addf %492, %495 : vector<4x256xf32>
    %c10_244 = arith.constant 10 : index
    %c5_245 = arith.constant 5 : index
    %497 = memref.load %arg1[%c10_244, %c5_245] : memref<16x9xf32, #tpu.memory_space<smem>>
    %498 = vector.broadcast %497 : f32 to vector<4x256xf32>
    %499 = arith.mulf %61, %498 : vector<4x256xf32>
    %500 = arith.addf %496, %499 : vector<4x256xf32>
    %c10_246 = arith.constant 10 : index
    %c6_247 = arith.constant 6 : index
    %501 = memref.load %arg1[%c10_246, %c6_247] : memref<16x9xf32, #tpu.memory_space<smem>>
    %502 = vector.broadcast %501 : f32 to vector<4x256xf32>
    %503 = arith.mulf %73, %502 : vector<4x256xf32>
    %504 = arith.addf %500, %503 : vector<4x256xf32>
    %c10_248 = arith.constant 10 : index
    %c7_249 = arith.constant 7 : index
    %505 = memref.load %arg1[%c10_248, %c7_249] : memref<16x9xf32, #tpu.memory_space<smem>>
    %506 = vector.broadcast %505 : f32 to vector<4x256xf32>
    %507 = arith.mulf %85, %506 : vector<4x256xf32>
    %508 = arith.addf %504, %507 : vector<4x256xf32>
    %c10_250 = arith.constant 10 : index
    %c8_251 = arith.constant 8 : index
    %509 = memref.load %arg1[%c10_250, %c8_251] : memref<16x9xf32, #tpu.memory_space<smem>>
    %510 = vector.broadcast %509 : f32 to vector<4x256xf32>
    %511 = arith.mulf %97, %510 : vector<4x256xf32>
    %512 = arith.addf %508, %511 : vector<4x256xf32>
    %c0_252 = arith.constant 0 : index
    %c10_253 = arith.constant 10 : index
    %c0_254 = arith.constant 0 : index
    %513 = vector.load %arg3[%c0_252, %c10_253, %c0_254] : memref<4x16x256xf32, #tpu.memory_space<vmem>>, vector<4x1x256xf32>
    %514 = vector.shape_cast %513 : vector<4x1x256xf32> to vector<4x256xf32>
    %515 = vector.shape_cast %512 : vector<4x256xf32> to vector<4x1x256xf32>
    tpu.vector_store %arg3[%c0_252, %c10_253, %c0_254], %515 {strides = array<i32>} : memref<4x16x256xf32, #tpu.memory_space<vmem>>, vector<4x1x256xf32>,
    %c11 = arith.constant 11 : index
    %c0_255 = arith.constant 0 : index
    %516 = memref.load %arg1[%c11, %c0_255] : memref<16x9xf32, #tpu.memory_space<smem>>
    %517 = vector.broadcast %516 : f32 to vector<4x256xf32>
    %518 = arith.mulf %13, %517 : vector<4x256xf32>
    %c11_256 = arith.constant 11 : index
    %c1_257 = arith.constant 1 : index
    %519 = memref.load %arg1[%c11_256, %c1_257] : memref<16x9xf32, #tpu.memory_space<smem>>
    %520 = vector.broadcast %519 : f32 to vector<4x256xf32>
    %521 = arith.mulf %25, %520 : vector<4x256xf32>
    %522 = arith.addf %518, %521 : vector<4x256xf32>
    %c11_258 = arith.constant 11 : index
    %c2_259 = arith.constant 2 : index
    %523 = memref.load %arg1[%c11_258, %c2_259] : memref<16x9xf32, #tpu.memory_space<smem>>
    %524 = vector.broadcast %523 : f32 to vector<4x256xf32>
    %525 = arith.mulf %37, %524 : vector<4x256xf32>
    %526 = arith.addf %522, %525 : vector<4x256xf32>
    %c11_260 = arith.constant 11 : index
    %c3_261 = arith.constant 3 : index
    %527 = memref.load %arg1[%c11_260, %c3_261] : memref<16x9xf32, #tpu.memory_space<smem>>
    %528 = vector.broadcast %527 : f32 to vector<4x256xf32>
    %529 = arith.mulf %49, %528 : vector<4x256xf32>
    %530 = arith.addf %526, %529 : vector<4x256xf32>
    %c11_262 = arith.constant 11 : index
    %c4_263 = arith.constant 4 : index
    %531 = memref.load %arg1[%c11_262, %c4_263] : memref<16x9xf32, #tpu.memory_space<smem>>
    %532 = vector.broadcast %531 : f32 to vector<4x256xf32>
    %533 = arith.mulf %0, %532 : vector<4x256xf32>
    %534 = arith.addf %530, %533 : vector<4x256xf32>
    %c11_264 = arith.constant 11 : index
    %c5_265 = arith.constant 5 : index
    %535 = memref.load %arg1[%c11_264, %c5_265] : memref<16x9xf32, #tpu.memory_space<smem>>
    %536 = vector.broadcast %535 : f32 to vector<4x256xf32>
    %537 = arith.mulf %61, %536 : vector<4x256xf32>
    %538 = arith.addf %534, %537 : vector<4x256xf32>
    %c11_266 = arith.constant 11 : index
    %c6_267 = arith.constant 6 : index
    %539 = memref.load %arg1[%c11_266, %c6_267] : memref<16x9xf32, #tpu.memory_space<smem>>
    %540 = vector.broadcast %539 : f32 to vector<4x256xf32>
    %541 = arith.mulf %73, %540 : vector<4x256xf32>
    %542 = arith.addf %538, %541 : vector<4x256xf32>
    %c11_268 = arith.constant 11 : index
    %c7_269 = arith.constant 7 : index
    %543 = memref.load %arg1[%c11_268, %c7_269] : memref<16x9xf32, #tpu.memory_space<smem>>
    %544 = vector.broadcast %543 : f32 to vector<4x256xf32>
    %545 = arith.mulf %85, %544 : vector<4x256xf32>
    %546 = arith.addf %542, %545 : vector<4x256xf32>
    %c11_270 = arith.constant 11 : index
    %c8_271 = arith.constant 8 : index
    %547 = memref.load %arg1[%c11_270, %c8_271] : memref<16x9xf32, #tpu.memory_space<smem>>
    %548 = vector.broadcast %547 : f32 to vector<4x256xf32>
    %549 = arith.mulf %97, %548 : vector<4x256xf32>
    %550 = arith.addf %546, %549 : vector<4x256xf32>
    %c0_272 = arith.constant 0 : index
    %c11_273 = arith.constant 11 : index
    %c0_274 = arith.constant 0 : index
    %551 = vector.load %arg3[%c0_272, %c11_273, %c0_274] : memref<4x16x256xf32, #tpu.memory_space<vmem>>, vector<4x1x256xf32>
    %552 = vector.shape_cast %551 : vector<4x1x256xf32> to vector<4x256xf32>
    %553 = vector.shape_cast %550 : vector<4x256xf32> to vector<4x1x256xf32>
    tpu.vector_store %arg3[%c0_272, %c11_273, %c0_274], %553 {strides = array<i32>} : memref<4x16x256xf32, #tpu.memory_space<vmem>>, vector<4x1x256xf32>,
    %c12 = arith.constant 12 : index
    %c0_275 = arith.constant 0 : index
    %554 = memref.load %arg1[%c12, %c0_275] : memref<16x9xf32, #tpu.memory_space<smem>>
    %555 = vector.broadcast %554 : f32 to vector<4x256xf32>
    %556 = arith.mulf %13, %555 : vector<4x256xf32>
    %c12_276 = arith.constant 12 : index
    %c1_277 = arith.constant 1 : index
    %557 = memref.load %arg1[%c12_276, %c1_277] : memref<16x9xf32, #tpu.memory_space<smem>>
    %558 = vector.broadcast %557 : f32 to vector<4x256xf32>
    %559 = arith.mulf %25, %558 : vector<4x256xf32>
    %560 = arith.addf %556, %559 : vector<4x256xf32>
    %c12_278 = arith.constant 12 : index
    %c2_279 = arith.constant 2 : index
    %561 = memref.load %arg1[%c12_278, %c2_279] : memref<16x9xf32, #tpu.memory_space<smem>>
    %562 = vector.broadcast %561 : f32 to vector<4x256xf32>
    %563 = arith.mulf %37, %562 : vector<4x256xf32>
    %564 = arith.addf %560, %563 : vector<4x256xf32>
    %c12_280 = arith.constant 12 : index
    %c3_281 = arith.constant 3 : index
    %565 = memref.load %arg1[%c12_280, %c3_281] : memref<16x9xf32, #tpu.memory_space<smem>>
    %566 = vector.broadcast %565 : f32 to vector<4x256xf32>
    %567 = arith.mulf %49, %566 : vector<4x256xf32>
    %568 = arith.addf %564, %567 : vector<4x256xf32>
    %c12_282 = arith.constant 12 : index
    %c4_283 = arith.constant 4 : index
    %569 = memref.load %arg1[%c12_282, %c4_283] : memref<16x9xf32, #tpu.memory_space<smem>>
    %570 = vector.broadcast %569 : f32 to vector<4x256xf32>
    %571 = arith.mulf %0, %570 : vector<4x256xf32>
    %572 = arith.addf %568, %571 : vector<4x256xf32>
    %c12_284 = arith.constant 12 : index
    %c5_285 = arith.constant 5 : index
    %573 = memref.load %arg1[%c12_284, %c5_285] : memref<16x9xf32, #tpu.memory_space<smem>>
    %574 = vector.broadcast %573 : f32 to vector<4x256xf32>
    %575 = arith.mulf %61, %574 : vector<4x256xf32>
    %576 = arith.addf %572, %575 : vector<4x256xf32>
    %c12_286 = arith.constant 12 : index
    %c6_287 = arith.constant 6 : index
    %577 = memref.load %arg1[%c12_286, %c6_287] : memref<16x9xf32, #tpu.memory_space<smem>>
    %578 = vector.broadcast %577 : f32 to vector<4x256xf32>
    %579 = arith.mulf %73, %578 : vector<4x256xf32>
    %580 = arith.addf %576, %579 : vector<4x256xf32>
    %c12_288 = arith.constant 12 : index
    %c7_289 = arith.constant 7 : index
    %581 = memref.load %arg1[%c12_288, %c7_289] : memref<16x9xf32, #tpu.memory_space<smem>>
    %582 = vector.broadcast %581 : f32 to vector<4x256xf32>
    %583 = arith.mulf %85, %582 : vector<4x256xf32>
    %584 = arith.addf %580, %583 : vector<4x256xf32>
    %c12_290 = arith.constant 12 : index
    %c8_291 = arith.constant 8 : index
    %585 = memref.load %arg1[%c12_290, %c8_291] : memref<16x9xf32, #tpu.memory_space<smem>>
    %586 = vector.broadcast %585 : f32 to vector<4x256xf32>
    %587 = arith.mulf %97, %586 : vector<4x256xf32>
    %588 = arith.addf %584, %587 : vector<4x256xf32>
    %c0_292 = arith.constant 0 : index
    %c12_293 = arith.constant 12 : index
    %c0_294 = arith.constant 0 : index
    %589 = vector.load %arg3[%c0_292, %c12_293, %c0_294] : memref<4x16x256xf32, #tpu.memory_space<vmem>>, vector<4x1x256xf32>
    %590 = vector.shape_cast %589 : vector<4x1x256xf32> to vector<4x256xf32>
    %591 = vector.shape_cast %588 : vector<4x256xf32> to vector<4x1x256xf32>
    tpu.vector_store %arg3[%c0_292, %c12_293, %c0_294], %591 {strides = array<i32>} : memref<4x16x256xf32, #tpu.memory_space<vmem>>, vector<4x1x256xf32>,
    %c13 = arith.constant 13 : index
    %c0_295 = arith.constant 0 : index
    %592 = memref.load %arg1[%c13, %c0_295] : memref<16x9xf32, #tpu.memory_space<smem>>
    %593 = vector.broadcast %592 : f32 to vector<4x256xf32>
    %594 = arith.mulf %13, %593 : vector<4x256xf32>
    %c13_296 = arith.constant 13 : index
    %c1_297 = arith.constant 1 : index
    %595 = memref.load %arg1[%c13_296, %c1_297] : memref<16x9xf32, #tpu.memory_space<smem>>
    %596 = vector.broadcast %595 : f32 to vector<4x256xf32>
    %597 = arith.mulf %25, %596 : vector<4x256xf32>
    %598 = arith.addf %594, %597 : vector<4x256xf32>
    %c13_298 = arith.constant 13 : index
    %c2_299 = arith.constant 2 : index
    %599 = memref.load %arg1[%c13_298, %c2_299] : memref<16x9xf32, #tpu.memory_space<smem>>
    %600 = vector.broadcast %599 : f32 to vector<4x256xf32>
    %601 = arith.mulf %37, %600 : vector<4x256xf32>
    %602 = arith.addf %598, %601 : vector<4x256xf32>
    %c13_300 = arith.constant 13 : index
    %c3_301 = arith.constant 3 : index
    %603 = memref.load %arg1[%c13_300, %c3_301] : memref<16x9xf32, #tpu.memory_space<smem>>
    %604 = vector.broadcast %603 : f32 to vector<4x256xf32>
    %605 = arith.mulf %49, %604 : vector<4x256xf32>
    %606 = arith.addf %602, %605 : vector<4x256xf32>
    %c13_302 = arith.constant 13 : index
    %c4_303 = arith.constant 4 : index
    %607 = memref.load %arg1[%c13_302, %c4_303] : memref<16x9xf32, #tpu.memory_space<smem>>
    %608 = vector.broadcast %607 : f32 to vector<4x256xf32>
    %609 = arith.mulf %0, %608 : vector<4x256xf32>
    %610 = arith.addf %606, %609 : vector<4x256xf32>
    %c13_304 = arith.constant 13 : index
    %c5_305 = arith.constant 5 : index
    %611 = memref.load %arg1[%c13_304, %c5_305] : memref<16x9xf32, #tpu.memory_space<smem>>
    %612 = vector.broadcast %611 : f32 to vector<4x256xf32>
    %613 = arith.mulf %61, %612 : vector<4x256xf32>
    %614 = arith.addf %610, %613 : vector<4x256xf32>
    %c13_306 = arith.constant 13 : index
    %c6_307 = arith.constant 6 : index
    %615 = memref.load %arg1[%c13_306, %c6_307] : memref<16x9xf32, #tpu.memory_space<smem>>
    %616 = vector.broadcast %615 : f32 to vector<4x256xf32>
    %617 = arith.mulf %73, %616 : vector<4x256xf32>
    %618 = arith.addf %614, %617 : vector<4x256xf32>
    %c13_308 = arith.constant 13 : index
    %c7_309 = arith.constant 7 : index
    %619 = memref.load %arg1[%c13_308, %c7_309] : memref<16x9xf32, #tpu.memory_space<smem>>
    %620 = vector.broadcast %619 : f32 to vector<4x256xf32>
    %621 = arith.mulf %85, %620 : vector<4x256xf32>
    %622 = arith.addf %618, %621 : vector<4x256xf32>
    %c13_310 = arith.constant 13 : index
    %c8_311 = arith.constant 8 : index
    %623 = memref.load %arg1[%c13_310, %c8_311] : memref<16x9xf32, #tpu.memory_space<smem>>
    %624 = vector.broadcast %623 : f32 to vector<4x256xf32>
    %625 = arith.mulf %97, %624 : vector<4x256xf32>
    %626 = arith.addf %622, %625 : vector<4x256xf32>
    %c0_312 = arith.constant 0 : index
    %c13_313 = arith.constant 13 : index
    %c0_314 = arith.constant 0 : index
    %627 = vector.load %arg3[%c0_312, %c13_313, %c0_314] : memref<4x16x256xf32, #tpu.memory_space<vmem>>, vector<4x1x256xf32>
    %628 = vector.shape_cast %627 : vector<4x1x256xf32> to vector<4x256xf32>
    %629 = vector.shape_cast %626 : vector<4x256xf32> to vector<4x1x256xf32>
    tpu.vector_store %arg3[%c0_312, %c13_313, %c0_314], %629 {strides = array<i32>} : memref<4x16x256xf32, #tpu.memory_space<vmem>>, vector<4x1x256xf32>,
    %c14 = arith.constant 14 : index
    %c0_315 = arith.constant 0 : index
    %630 = memref.load %arg1[%c14, %c0_315] : memref<16x9xf32, #tpu.memory_space<smem>>
    %631 = vector.broadcast %630 : f32 to vector<4x256xf32>
    %632 = arith.mulf %13, %631 : vector<4x256xf32>
    %c14_316 = arith.constant 14 : index
    %c1_317 = arith.constant 1 : index
    %633 = memref.load %arg1[%c14_316, %c1_317] : memref<16x9xf32, #tpu.memory_space<smem>>
    %634 = vector.broadcast %633 : f32 to vector<4x256xf32>
    %635 = arith.mulf %25, %634 : vector<4x256xf32>
    %636 = arith.addf %632, %635 : vector<4x256xf32>
    %c14_318 = arith.constant 14 : index
    %c2_319 = arith.constant 2 : index
    %637 = memref.load %arg1[%c14_318, %c2_319] : memref<16x9xf32, #tpu.memory_space<smem>>
    %638 = vector.broadcast %637 : f32 to vector<4x256xf32>
    %639 = arith.mulf %37, %638 : vector<4x256xf32>
    %640 = arith.addf %636, %639 : vector<4x256xf32>
    %c14_320 = arith.constant 14 : index
    %c3_321 = arith.constant 3 : index
    %641 = memref.load %arg1[%c14_320, %c3_321] : memref<16x9xf32, #tpu.memory_space<smem>>
    %642 = vector.broadcast %641 : f32 to vector<4x256xf32>
    %643 = arith.mulf %49, %642 : vector<4x256xf32>
    %644 = arith.addf %640, %643 : vector<4x256xf32>
    %c14_322 = arith.constant 14 : index
    %c4_323 = arith.constant 4 : index
    %645 = memref.load %arg1[%c14_322, %c4_323] : memref<16x9xf32, #tpu.memory_space<smem>>
    %646 = vector.broadcast %645 : f32 to vector<4x256xf32>
    %647 = arith.mulf %0, %646 : vector<4x256xf32>
    %648 = arith.addf %644, %647 : vector<4x256xf32>
    %c14_324 = arith.constant 14 : index
    %c5_325 = arith.constant 5 : index
    %649 = memref.load %arg1[%c14_324, %c5_325] : memref<16x9xf32, #tpu.memory_space<smem>>
    %650 = vector.broadcast %649 : f32 to vector<4x256xf32>
    %651 = arith.mulf %61, %650 : vector<4x256xf32>
    %652 = arith.addf %648, %651 : vector<4x256xf32>
    %c14_326 = arith.constant 14 : index
    %c6_327 = arith.constant 6 : index
    %653 = memref.load %arg1[%c14_326, %c6_327] : memref<16x9xf32, #tpu.memory_space<smem>>
    %654 = vector.broadcast %653 : f32 to vector<4x256xf32>
    %655 = arith.mulf %73, %654 : vector<4x256xf32>
    %656 = arith.addf %652, %655 : vector<4x256xf32>
    %c14_328 = arith.constant 14 : index
    %c7_329 = arith.constant 7 : index
    %657 = memref.load %arg1[%c14_328, %c7_329] : memref<16x9xf32, #tpu.memory_space<smem>>
    %658 = vector.broadcast %657 : f32 to vector<4x256xf32>
    %659 = arith.mulf %85, %658 : vector<4x256xf32>
    %660 = arith.addf %656, %659 : vector<4x256xf32>
    %c14_330 = arith.constant 14 : index
    %c8_331 = arith.constant 8 : index
    %661 = memref.load %arg1[%c14_330, %c8_331] : memref<16x9xf32, #tpu.memory_space<smem>>
    %662 = vector.broadcast %661 : f32 to vector<4x256xf32>
    %663 = arith.mulf %97, %662 : vector<4x256xf32>
    %664 = arith.addf %660, %663 : vector<4x256xf32>
    %c0_332 = arith.constant 0 : index
    %c14_333 = arith.constant 14 : index
    %c0_334 = arith.constant 0 : index
    %665 = vector.load %arg3[%c0_332, %c14_333, %c0_334] : memref<4x16x256xf32, #tpu.memory_space<vmem>>, vector<4x1x256xf32>
    %666 = vector.shape_cast %665 : vector<4x1x256xf32> to vector<4x256xf32>
    %667 = vector.shape_cast %664 : vector<4x256xf32> to vector<4x1x256xf32>
    tpu.vector_store %arg3[%c0_332, %c14_333, %c0_334], %667 {strides = array<i32>} : memref<4x16x256xf32, #tpu.memory_space<vmem>>, vector<4x1x256xf32>,
    %c15 = arith.constant 15 : index
    %c0_335 = arith.constant 0 : index
    %668 = memref.load %arg1[%c15, %c0_335] : memref<16x9xf32, #tpu.memory_space<smem>>
    %669 = vector.broadcast %668 : f32 to vector<4x256xf32>
    %670 = arith.mulf %13, %669 : vector<4x256xf32>
    %c15_336 = arith.constant 15 : index
    %c1_337 = arith.constant 1 : index
    %671 = memref.load %arg1[%c15_336, %c1_337] : memref<16x9xf32, #tpu.memory_space<smem>>
    %672 = vector.broadcast %671 : f32 to vector<4x256xf32>
    %673 = arith.mulf %25, %672 : vector<4x256xf32>
    %674 = arith.addf %670, %673 : vector<4x256xf32>
    %c15_338 = arith.constant 15 : index
    %c2_339 = arith.constant 2 : index
    %675 = memref.load %arg1[%c15_338, %c2_339] : memref<16x9xf32, #tpu.memory_space<smem>>
    %676 = vector.broadcast %675 : f32 to vector<4x256xf32>
    %677 = arith.mulf %37, %676 : vector<4x256xf32>
    %678 = arith.addf %674, %677 : vector<4x256xf32>
    %c15_340 = arith.constant 15 : index
    %c3_341 = arith.constant 3 : index
    %679 = memref.load %arg1[%c15_340, %c3_341] : memref<16x9xf32, #tpu.memory_space<smem>>
    %680 = vector.broadcast %679 : f32 to vector<4x256xf32>
    %681 = arith.mulf %49, %680 : vector<4x256xf32>
    %682 = arith.addf %678, %681 : vector<4x256xf32>
    %c15_342 = arith.constant 15 : index
    %c4_343 = arith.constant 4 : index
    %683 = memref.load %arg1[%c15_342, %c4_343] : memref<16x9xf32, #tpu.memory_space<smem>>
    %684 = vector.broadcast %683 : f32 to vector<4x256xf32>
    %685 = arith.mulf %0, %684 : vector<4x256xf32>
    %686 = arith.addf %682, %685 : vector<4x256xf32>
    %c15_344 = arith.constant 15 : index
    %c5_345 = arith.constant 5 : index
    %687 = memref.load %arg1[%c15_344, %c5_345] : memref<16x9xf32, #tpu.memory_space<smem>>
    %688 = vector.broadcast %687 : f32 to vector<4x256xf32>
    %689 = arith.mulf %61, %688 : vector<4x256xf32>
    %690 = arith.addf %686, %689 : vector<4x256xf32>
    %c15_346 = arith.constant 15 : index
    %c6_347 = arith.constant 6 : index
    %691 = memref.load %arg1[%c15_346, %c6_347] : memref<16x9xf32, #tpu.memory_space<smem>>
    %692 = vector.broadcast %691 : f32 to vector<4x256xf32>
    %693 = arith.mulf %73, %692 : vector<4x256xf32>
    %694 = arith.addf %690, %693 : vector<4x256xf32>
    %c15_348 = arith.constant 15 : index
    %c7_349 = arith.constant 7 : index
    %695 = memref.load %arg1[%c15_348, %c7_349] : memref<16x9xf32, #tpu.memory_space<smem>>
    %696 = vector.broadcast %695 : f32 to vector<4x256xf32>
    %697 = arith.mulf %85, %696 : vector<4x256xf32>
    %698 = arith.addf %694, %697 : vector<4x256xf32>
    %c15_350 = arith.constant 15 : index
    %c8_351 = arith.constant 8 : index
    %699 = memref.load %arg1[%c15_350, %c8_351] : memref<16x9xf32, #tpu.memory_space<smem>>
    %700 = vector.broadcast %699 : f32 to vector<4x256xf32>
    %701 = arith.mulf %97, %700 : vector<4x256xf32>
    %702 = arith.addf %698, %701 : vector<4x256xf32>
    %c0_352 = arith.constant 0 : index
    %c15_353 = arith.constant 15 : index
    %c0_354 = arith.constant 0 : index
    %703 = vector.load %arg3[%c0_352, %c15_353, %c0_354] : memref<4x16x256xf32, #tpu.memory_space<vmem>>, vector<4x1x256xf32>
    %704 = vector.shape_cast %703 : vector<4x1x256xf32> to vector<4x256xf32>
    %705 = vector.shape_cast %702 : vector<4x256xf32> to vector<4x1x256xf32>
    tpu.vector_store %arg3[%c0_352, %c15_353, %c0_354], %705 {strides = array<i32>} : memref<4x16x256xf32, #tpu.memory_space<vmem>>, vector<4x1x256xf32>,
    return
  }
  func.func @transform_0(%arg0: i32) -> (i32, i32) {
    %c0_i32 = arith.constant 0 : i32
    %c0_i32_0 = arith.constant 0 : i32
    %c0_i32_1 = arith.constant 0 : i32
    return %c0_i32, %c0_i32_0 : i32, i32
  }
  func.func @transform_1(%arg0: i32) -> (i32, i32) {
    %c0_i32 = arith.constant 0 : i32
    %c0_i32_0 = arith.constant 0 : i32
    return %arg0, %c0_i32 : i32, i32
  }
  func.func @transform_2(%arg0: i32) -> (i32, i32, i32) {
    %c0_i32 = arith.constant 0 : i32
    %c0_i32_0 = arith.constant 0 : i32
    %c0_i32_1 = arith.constant 0 : i32
    return %arg0, %c0_i32, %c0_i32_0 : i32, i32, i32
  }
}

</mosaic_0001>

<llo_original>
// kernel: tpu_custom_call.1
$region0: #{tpu_custom_call.1}
  #allocation0 [shape = 'u32[]', space=smem, size = 0x4, offset = 0x4, fixed_abs, tag = 'smem constant byte address 0x4 - core index']
  #allocation1 [shape = 'u32[144,128]{1,0:T(1,128)}', space=vmem, size = 0x12000, scoped, tag = 'internal scratch']
  %s0 = inlined_call_operand.hbm [shape: f32[16,9], index: 0, kind: input, shape index: {}]
  %s1 = inlined_call_operand.hbm [shape: f32[4,256], index: 1, kind: input, shape index: {}]
  %s2 = inlined_call_operand.hbm [shape: f32[4,16,256], index: 2, kind: output, shape index: {}]
  %s3 = sld [smem:[#allocation0]]
  $region26: #{tpu_custom_call.1} parent=0
    _
  %s5 = ssub.s32 1, %s3
  %s6 = scalar_select 0, %s5, %s3
  $region1: #{tpu_custom_call.1} parent=0
    #allocation2 [shape = 'u8[8192]{0}', space=smem, size = 0x2000, scoped, tag = 'input window, operand 0, single buffered']
    #allocation3 [shape = 's32[1]{0}', space=sflag, size = 0x4, scoped, tag = 'scoped memory for tpu_custom_call.1']
    #allocation4 [shape = 's32[1]{0}', space=sflag, size = 0x4, scoped, tag = 'scoped memory for tpu_custom_call.1']
    #allocation5 [shape = 's32[1]{0}', space=sflag, size = 0x4, scoped, tag = 'scoped memory for tpu_custom_call.1']
    #allocation6 [shape = 'u8[4096]{0}', space=vmem, size = 0x1000, scoped, tag = 'input window, operand 1, single buffered']
    #allocation7 [shape = 'u8[65536]{0}', space=vmem, size = 0x10000, scoped, tag = 'output window, operand 0, single buffered']
    %7 = vsyncpa [#allocation5], 0
    %8 = vsyncpa [#allocation3], 0
    %9 = vsyncpa [#allocation4], 0
    // Predicated region
    $region2: #{tpu_custom_call.1} parent=1 // pred_check
      _
    $region3: #{tpu_custom_call.1} parent=1 // pred_check_branch
      %11 = sbr.rel (0) target = $region5
    $region4: #{tpu_custom_call.1} parent=1 // pred_region
      %s13 = ssub.s32 256, 256
      %14 = vsyncadd [#allocation5], %s13
      %19 = dma.hbm_to_smem %s0, 256, [#allocation2], [#allocation5], 128, 128, 8
    $region5: #{tpu_custom_call.1} parent=1 // pred_fallthru
      _
    // Predicated region
    $region6: #{tpu_custom_call.1} parent=1 // pred_check
      _
    $region7: #{tpu_custom_call.1} parent=1 // pred_check_branch
      %21 = sbr.rel (0) target = $region9
    $region8: #{tpu_custom_call.1} parent=1 // pred_region
      %s23 = ssub.s32 128, 128
      %24 = vsyncadd [#allocation3], %s23
      %s26 = sshll.u32 [#allocation6], 4
      %s27 = int_to_ptr.vmem [resolvable:$true] %s26
      %29 = dma.hbm_to_vmem [thread:$0]  %s1, 128, %s27, [#allocation3]
    $region9: #{tpu_custom_call.1} parent=1 // pred_fallthru
      _
    // Predicated region
    $region10: #{tpu_custom_call.1} parent=1 // pred_check
      _
    $region11: #{tpu_custom_call.1} parent=1 // pred_check_branch
      %31 = sbr.rel (0) target = $region13
    $region12: #{tpu_custom_call.1} parent=1 // pred_region
      %32 = dma.done [#allocation5], 256
    $region13: #{tpu_custom_call.1} parent=1 // pred_fallthru
      _
    // Predicated region
    $region14: #{tpu_custom_call.1} parent=1 // pred_check
      _
    $region15: #{tpu_custom_call.1} parent=1 // pred_check_branch
      %34 = sbr.rel (0) target = $region17
    $region16: #{tpu_custom_call.1} parent=1 // pred_region
      %35 = dma.done [#allocation3], 128
    $region17: #{tpu_custom_call.1} parent=1 // pred_fallthru
      _
    %36 = sfence
    %v37 = vld [vmem:[#allocation6] sm:$0xff]
    %v38 = vlaneseq
    %v39 = vand.u32 %v38, 127
    %v40 = vadd.s32 %v39, 128
    %v42 = vcombine.high %v37, %v37
    %44 = vrot.lane.b32.xlu0 %v37, 4
    %v45 = vpop.permute.xlu0 %44
    %46 = vrot.lane.b32.xlu0 %v42, 4
    %v47 = vpop.permute.xlu0 %46
    %vm48 = vcmp.lt.s32.totalorder %v39, 4
    %v49 = vsel %vm48, %v45, %v47
    %v50 = vsel %vm48, %v47, %v45
    %v51 = vadd.s32 %v39, 4294967292
    %v52 = vadd.s32 %v40, 4294967292
    %vm53 = vcmp.ge.s32.totalorder %v51, 0
    %vm54 = vcmp.ge.s32.totalorder %v52, 0
    %vm55 = vcmp.lt.s32.totalorder %v51, 256
    %vm56 = vcmp.lt.s32.totalorder %v52, 256
    %vm57 = vmand %vm53, %vm55
    %vm58 = vmand %vm54, %vm56
    %v59 = vsel %vm57, %v50, 0.0
    %v60 = vsel %vm58, %v49, 0.0
    %61 = vrot.lane.b32.xlu0 %v37, 3
    %v62 = vpop.permute.xlu0 %61
    %63 = vrot.lane.b32.xlu0 %v42, 3
    %v64 = vpop.permute.xlu0 %63
    %vm65 = vcmp.lt.s32.totalorder %v39, 3
    %v66 = vsel %vm65, %v62, %v64
    %v67 = vsel %vm65, %v64, %v62
    %v68 = vadd.s32 %v39, 4294967293
    %v69 = vadd.s32 %v40, 4294967293
    %vm70 = vcmp.ge.s32.totalorder %v68, 0
    %vm71 = vcmp.ge.s32.totalorder %v69, 0
    %vm72 = vcmp.lt.s32.totalorder %v68, 256
    %vm73 = vcmp.lt.s32.totalorder %v69, 256
    %vm74 = vmand %vm70, %vm72
    %vm75 = vmand %vm71, %vm73
    %v76 = vsel %vm74, %v67, 0.0
    %v77 = vsel %vm75, %v66, 0.0
    %78 = vrot.lane.b32.xlu0 %v37, 2
    %v79 = vpop.permute.xlu0 %78
    %80 = vrot.lane.b32.xlu0 %v42, 2
    %v81 = vpop.permute.xlu0 %80
    %vm82 = vcmp.lt.s32.totalorder %v39, 2
    %v83 = vsel %vm82, %v79, %v81
    %v84 = vsel %vm82, %v81, %v79
    %v85 = vadd.s32 %v39, 4294967294
    %v86 = vadd.s32 %v40, 4294967294
    %vm87 = vcmp.ge.s32.totalorder %v85, 0
    %vm88 = vcmp.ge.s32.totalorder %v86, 0
    %vm89 = vcmp.lt.s32.totalorder %v85, 256
    %vm90 = vcmp.lt.s32.totalorder %v86, 256
    %vm91 = vmand %vm87, %vm89
    %vm92 = vmand %vm88, %vm90
    %v93 = vsel %vm91, %v84, 0.0
    %v94 = vsel %vm92, %v83, 0.0
    %95 = vrot.lane.b32.xlu0 %v37, 1
    %v96 = vpop.permute.xlu0 %95
    %97 = vrot.lane.b32.xlu0 %v42, 1
    %v98 = vpop.permute.xlu0 %97
    %vm99 = vcmp.lt.s32.totalorder %v39, 1
    %v100 = vsel %vm99, %v96, %v98
    %v101 = vsel %vm99, %v98, %v96
    %v102 = vadd.s32 %v39, 4294967295
    %v103 = vadd.s32 %v40, 4294967295
    %vm104 = vcmp.ge.s32.totalorder %v102, 0
    %vm105 = vcmp.ge.s32.totalorder %v103, 0
    %vm106 = vcmp.lt.s32.totalorder %v102, 256
    %vm107 = vcmp.lt.s32.totalorder %v103, 256
    %vm108 = vmand %vm104, %vm106
    %vm109 = vmand %vm105, %vm107
    %v110 = vsel %vm108, %v101, 0.0
    %v111 = vsel %vm109, %v100, 0.0
    %112 = vrot.lane.b32.xlu0 %v37, 127
    %v113 = vpop.permute.xlu0 %112
    %114 = vrot.lane.b32.xlu0 %v42, 127
    %v115 = vpop.permute.xlu0 %114
    %vm116 = vcmp.lt.s32.totalorder %v39, 127
    %v117 = vsel %vm116, %v113, %v115
    %v118 = vsel %vm116, %v115, %v113
    %v119 = vadd.s32 %v39, 1
    %v120 = vadd.s32 %v40, 1
    %vm121 = vcmp.ge.s32.totalorder %v119, 0
    %vm122 = vcmp.ge.s32.totalorder %v120, 0
    %vm123 = vcmp.lt.s32.totalorder %v119, 256
    %vm124 = vcmp.lt.s32.totalorder %v120, 256
    %vm125 = vmand %vm121, %vm123
    %vm126 = vmand %vm122, %vm124
    %v127 = vsel %vm125, %v117, 0.0
    %v128 = vsel %vm126, %v118, 0.0
    %129 = vrot.lane.b32.xlu0 %v37, 126
    %v130 = vpop.permute.xlu0 %129
    %131 = vrot.lane.b32.xlu0 %v42, 126
    %v132 = vpop.permute.xlu0 %131
    %vm133 = vcmp.lt.s32.totalorder %v39, 126
    %v134 = vsel %vm133, %v130, %v132
    %v135 = vsel %vm133, %v132, %v130
    %v136 = vadd.s32 %v39, 2
    %v137 = vadd.s32 %v40, 2
    %vm138 = vcmp.ge.s32.totalorder %v136, 0
    %vm139 = vcmp.ge.s32.totalorder %v137, 0
    %vm140 = vcmp.lt.s32.totalorder %v136, 256
    %vm141 = vcmp.lt.s32.totalorder %v137, 256
    %vm142 = vmand %vm138, %vm140
    %vm143 = vmand %vm139, %vm141
    %v144 = vsel %vm142, %v134, 0.0
    %v145 = vsel %vm143, %v135, 0.0
    %146 = vrot.lane.b32.xlu0 %v37, 125
    %v147 = vpop.permute.xlu0 %146
    %148 = vrot.lane.b32.xlu0 %v42, 125
    %v149 = vpop.permute.xlu0 %148
    %vm150 = vcmp.lt.s32.totalorder %v39, 125
    %v151 = vsel %vm150, %v147, %v149
    %v152 = vsel %vm150, %v149, %v147
    %v153 = vadd.s32 %v39, 3
    %v154 = vadd.s32 %v40, 3
    %vm155 = vcmp.ge.s32.totalorder %v153, 0
    %vm156 = vcmp.ge.s32.totalorder %v154, 0
    %vm157 = vcmp.lt.s32.totalorder %v153, 256
    %vm158 = vcmp.lt.s32.totalorder %v154, 256
    %vm159 = vmand %vm155, %vm157
    %vm160 = vmand %vm156, %vm158
    %v161 = vsel %vm159, %v151, 0.0
    %v162 = vsel %vm160, %v152, 0.0
    %163 = vrot.lane.b32.xlu0 %v37, 124
    %v164 = vpop.permute.xlu0 %163
    %165 = vrot.lane.b32.xlu0 %v42, 124
    %v166 = vpop.permute.xlu0 %165
    %vm167 = vcmp.lt.s32.totalorder %v39, 124
    %v168 = vsel %vm167, %v164, %v166
    %v169 = vsel %vm167, %v166, %v164
    %v170 = vadd.s32 %v39, 4
    %v171 = vadd.s32 %v40, 4
    %vm172 = vcmp.ge.s32.totalorder %v170, 0
    %vm173 = vcmp.ge.s32.totalorder %v171, 0
    %vm174 = vcmp.lt.s32.totalorder %v170, 256
    %vm175 = vcmp.lt.s32.totalorder %v171, 256
    %vm176 = vmand %vm172, %vm174
    %vm177 = vmand %vm173, %vm175
    %v178 = vsel %vm176, %v168, 0.0
    %v179 = vsel %vm177, %v169, 0.0
    %s180 = sld [smem:[#allocation2]]
    %v181 = vstv %s180
    %v182 = vmul.f32 %v59, %v181
    %v183 = vmul.f32 %v60, %v181
    %s184 = sld [smem:[#allocation2 + $0x1]]
    %v185 = vstv %s184
    %v186 = vmul.f32 %v76, %v185
    %v187 = vmul.f32 %v77, %v185
    %v188 = vadd.f32 %v182, %v186
    %v189 = vadd.f32 %v183, %v187
    %s190 = sld [smem:[#allocation2 + $0x2]]
    %v191 = vstv %s190
    %v192 = vmul.f32 %v93, %v191
    %v193 = vmul.f32 %v94, %v191
    %v194 = vadd.f32 %v188, %v192
    %v195 = vadd.f32 %v189, %v193
    %s196 = sld [smem:[#allocation2 + $0x3]]
    %v197 = vstv %s196
    %v198 = vmul.f32 %v110, %v197
    %v199 = vmul.f32 %v111, %v197
    %v200 = vadd.f32 %v194, %v198
    %v201 = vadd.f32 %v195, %v199
    %s202 = sld [smem:[#allocation2 + $0x4]]
    %v203 = vstv %s202
    %v204 = vmul.f32 %v37, %v203
    %v206 = vcombine.high %v204, %v204
    %v208 = vadd.f32 %v200, %v204
    %v209 = vadd.f32 %v201, %v206
    %s210 = sld [smem:[#allocation2 + $0x5]]
    %v211 = vstv %s210
    %v212 = vmul.f32 %v127, %v211
    %v213 = vmul.f32 %v128, %v211
    %v214 = vadd.f32 %v208, %v212
    %v215 = vadd.f32 %v209, %v213
    %s216 = sld [smem:[#allocation2 + $0x6]]
    %v217 = vstv %s216
    %v218 = vmul.f32 %v144, %v217
    %v219 = vmul.f32 %v145, %v217
    %v220 = vadd.f32 %v214, %v218
    %v221 = vadd.f32 %v215, %v219
    %s222 = sld [smem:[#allocation2 + $0x7]]
    %v223 = vstv %s222
    %v224 = vmul.f32 %v161, %v223
    %v225 = vmul.f32 %v162, %v223
    %v226 = vadd.f32 %v220, %v224
    %v227 = vadd.f32 %v221, %v225
    %s228 = sld [smem:[#allocation2 + $0x8]]
    %v229 = vstv %s228
    %v230 = vmul.f32 %v178, %v229
    %v231 = vmul.f32 %v179, %v229
    %v232 = vadd.f32 %v226, %v230
    %v233 = vadd.f32 %v227, %v231
    %v236 = vcombine.low %v232, %v233
    %v238 = vunpack.c.l.s4 1966171168
    %v239 = vunpack.c.0.s8 %v238
    %v240 = vlaneseq
    %v241 = vshrl.u32 %v240, 7
    %v242 = vsub.s32 %v239, %v241
    %v243 = vrot.slane %v236, %v242
    %v244 = vcombine.high %v243, %v243
    %v246 = vunpack.c.l.s4 1966171168
    %v247 = vunpack.c.0.s8 %v246
    %v248 = vlaneseq
    %v249 = vshrl.u32 %v248, 7
    %v250 = vsub.s32 %v247, %v249
    %v251 = vrot.slane %v243, %v250
    %v253 = vunpack.c.l.s4 1966171168
    %v254 = vunpack.c.0.s8 %v253
    %v255 = vlaneseq
    %v256 = vshrl.u32 %v255, 7
    %v257 = vsub.s32 %v254, %v256
    %v258 = vrot.slane %v244, %v257
    %v259 = vcombine.high %v251, %v251
    %v260 = vcombine.high %v258, %v258
    %v265 = vlaneseq
    %vm266 = vcmp.ge.s32.totalorder %v265, 0
    %vm267 = vcmp.lt.s32.totalorder %v265, 256
    %vm268 = vmand %vm266, %vm267
    %269 = vst.msk [vmem:[#allocation7] ss:$8 sm:$0x3] %vm268, %v251
    %270 = vst.msk [vmem:[#allocation7] ss:$8 sm:$0x0] %vm268, %v251
    %s271 = scalar_lea.vmem [#allocation7], 32
    %272 = vst.msk [vmem:[%s271] ss:$8 sm:$0x3] %vm268, %v258
    %273 = vst.msk [vmem:[%s271] ss:$8 sm:$0x0] %vm268, %v258
    %s274 = scalar_lea.vmem [#allocation7], 64
    %275 = vst.msk [vmem:[%s274] ss:$8 sm:$0x3] %vm268, %v259
    %276 = vst.msk [vmem:[%s274] ss:$8 sm:$0x0] %vm268, %v259
    %s277 = scalar_lea.vmem [#allocation7], 96
    %278 = vst.msk [vmem:[%s277] ss:$8 sm:$0x3] %vm268, %v260
    %279 = vst.msk [vmem:[%s277] ss:$8 sm:$0x0] %vm268, %v260
    %s280 = sld [smem:[#allocation2 + $0x80]]
    %v281 = vstv %s280
    %v282 = vmul.f32 %v59, %v281
    %v283 = vmul.f32 %v60, %v281
    %s284 = sld [smem:[#allocation2 + $0x81]]
    %v285 = vstv %s284
    %v286 = vmul.f32 %v76, %v285
    %v287 = vmul.f32 %v77, %v285
    %v288 = vadd.f32 %v282, %v286
    %v289 = vadd.f32 %v283, %v287
    %s290 = sld [smem:[#allocation2 + $0x82]]
    %v291 = vstv %s290
    %v292 = vmul.f32 %v93, %v291
    %v293 = vmul.f32 %v94, %v291
    %v294 = vadd.f32 %v288, %v292
    %v295 = vadd.f32 %v289, %v293
    %s296 = sld [smem:[#allocation2 + $0x83]]
    %v297 = vstv %s296
    %v298 = vmul.f32 %v110, %v297
    %v299 = vmul.f32 %v111, %v297
    %v300 = vadd.f32 %v294, %v298
    %v301 = vadd.f32 %v295, %v299
    %s302 = sld [smem:[#allocation2 + $0x84]]
    %v303 = vstv %s302
    %v304 = vmul.f32 %v37, %v303
    %v306 = vcombine.high %v304, %v304
    %v308 = vadd.f32 %v300, %v304
    %v309 = vadd.f32 %v301, %v306
    %s310 = sld [smem:[#allocation2 + $0x85]]
    %v311 = vstv %s310
    %v312 = vmul.f32 %v127, %v311
    %v313 = vmul.f32 %v128, %v311
    %v314 = vadd.f32 %v308, %v312
    %v315 = vadd.f32 %v309, %v313
    %s316 = sld [smem:[#allocation2 + $0x86]]
    %v317 = vstv %s316
    %v318 = vmul.f32 %v144, %v317
    %v319 = vmul.f32 %v145, %v317
    %v320 = vadd.f32 %v314, %v318
    %v321 = vadd.f32 %v315, %v319
    %s322 = sld [smem:[#allocation2 + $0x87]]
    %v323 = vstv %s322
    %v324 = vmul.f32 %v161, %v323
    %v325 = vmul.f32 %v162, %v323
    %v326 = vadd.f32 %v320, %v324
    %v327 = vadd.f32 %v321, %v325
    %s328 = sld [smem:[#allocation2 + $0x88]]
    %v329 = vstv %s328
    %v330 = vmul.f32 %v178, %v329
    %v331 = vmul.f32 %v179, %v329
    %v332 = vadd.f32 %v326, %v330
    %v333 = vadd.f32 %v327, %v331
    %v336 = vcombine.low %v332, %v333
    %v338 = vunpack.c.l.s4 1966171168
    %v339 = vunpack.c.0.s8 %v338
    %v340 = vlaneseq
    %v341 = vshrl.u32 %v340, 7
    %v342 = vsub.s32 %v339, %v341
    %v343 = vrot.slane %v336, %v342
    %v344 = vcombine.high %v343, %v343
    %v346 = vunpack.c.l.s4 1966171168
    %v347 = vunpack.c.0.s8 %v346
    %v348 = vlaneseq
    %v349 = vshrl.u32 %v348, 7
    %v350 = vsub.s32 %v347, %v349
    %v351 = vrot.slane %v343, %v350
    %v353 = vunpack.c.l.s4 1966171168
    %v354 = vunpack.c.0.s8 %v353
    %v355 = vlaneseq
    %v356 = vshrl.u32 %v355, 7
    %v357 = vsub.s32 %v354, %v356
    %v358 = vrot.slane %v344, %v357
    %v359 = vcombine.high %v351, %v351
    %v360 = vcombine.high %v358, %v358
    %s365 = scalar_lea.vmem [#allocation7], 1
    %366 = vst.msk [vmem:[%s365] ss:$8 sm:$0x3] %vm268, %v351
    %367 = vst.msk [vmem:[%s365] ss:$8 sm:$0x0] %vm268, %v351
    %s368 = scalar_lea.vmem [#allocation7], 33
    %369 = vst.msk [vmem:[%s368] ss:$8 sm:$0x3] %vm268, %v358
    %370 = vst.msk [vmem:[%s368] ss:$8 sm:$0x0] %vm268, %v358
    %s371 = scalar_lea.vmem [#allocation7], 65
    %372 = vst.msk [vmem:[%s371] ss:$8 sm:$0x3] %vm268, %v359
    %373 = vst.msk [vmem:[%s371] ss:$8 sm:$0x0] %vm268, %v359
    %s374 = scalar_lea.vmem [#allocation7], 97
    %375 = vst.msk [vmem:[%s374] ss:$8 sm:$0x3] %vm268, %v360
    %376 = vst.msk [vmem:[%s374] ss:$8 sm:$0x0] %vm268, %v360
    %s377 = sld [smem:[#allocation2 + $0x100]]
    %v378 = vstv %s377
    %v379 = vmul.f32 %v59, %v378
    %v380 = vmul.f32 %v60, %v378
    %s381 = sld [smem:[#allocation2 + $0x101]]
    %v382 = vstv %s381
    %v383 = vmul.f32 %v76, %v382
    %v384 = vmul.f32 %v77, %v382
    %v385 = vadd.f32 %v379, %v383
    %v386 = vadd.f32 %v380, %v384
    %s387 = sld [smem:[#allocation2 + $0x102]]
    %v388 = vstv %s387
    %v389 = vmul.f32 %v93, %v388
    %v390 = vmul.f32 %v94, %v388
    %v391 = vadd.f32 %v385, %v389
    %v392 = vadd.f32 %v386, %v390
    %s393 = sld [smem:[#allocation2 + $0x103]]
    %v394 = vstv %s393
    %v395 = vmul.f32 %v110, %v394
    %v396 = vmul.f32 %v111, %v394
    %v397 = vadd.f32 %v391, %v395
    %v398 = vadd.f32 %v392, %v396
    %s399 = sld [smem:[#allocation2 + $0x104]]
    %v400 = vstv %s399
    %v401 = vmul.f32 %v37, %v400
    %v403 = vcombine.high %v401, %v401
    %v405 = vadd.f32 %v397, %v401
    %v406 = vadd.f32 %v398, %v403
    %s407 = sld [smem:[#allocation2 + $0x105]]
    %v408 = vstv %s407
    %v409 = vmul.f32 %v127, %v408
    %v410 = vmul.f32 %v128, %v408
    %v411 = vadd.f32 %v405, %v409
    %v412 = vadd.f32 %v406, %v410
    %s413 = sld [smem:[#allocation2 + $0x106]]
    %v414 = vstv %s413
    %v415 = vmul.f32 %v144, %v414
    %v416 = vmul.f32 %v145, %v414
    %v417 = vadd.f32 %v411, %v415
    %v418 = vadd.f32 %v412, %v416
    %s419 = sld [smem:[#allocation2 + $0x107]]
    %v420 = vstv %s419
    %v421 = vmul.f32 %v161, %v420
    %v422 = vmul.f32 %v162, %v420
    %v423 = vadd.f32 %v417, %v421
    %v424 = vadd.f32 %v418, %v422
    %s425 = sld [smem:[#allocation2 + $0x108]]
    %v426 = vstv %s425
    %v427 = vmul.f32 %v178, %v426
    %v428 = vmul.f32 %v179, %v426
    %v429 = vadd.f32 %v423, %v427
    %v430 = vadd.f32 %v424, %v428
    %v433 = vcombine.low %v429, %v430
    %v435 = vunpack.c.l.s4 1966171168
    %v436 = vunpack.c.0.s8 %v435
    %v437 = vlaneseq
    %v438 = vshrl.u32 %v437, 7
    %v439 = vsub.s32 %v436, %v438
    %v440 = vrot.slane %v433, %v439
    %v441 = vcombine.high %v440, %v440
    %v443 = vunpack.c.l.s4 1966171168
    %v444 = vunpack.c.0.s8 %v443
    %v445 = vlaneseq
    %v446 = vshrl.u32 %v445, 7
    %v447 = vsub.s32 %v444, %v446
    %v448 = vrot.slane %v440, %v447
    %v450 = vunpack.c.l.s4 1966171168
    %v451 = vunpack.c.0.s8 %v450
    %v452 = vlaneseq
    %v453 = vshrl.u32 %v452, 7
    %v454 = vsub.s32 %v451, %v453
    %v455 = vrot.slane %v441, %v454
    %v456 = vcombine.high %v448, %v448
    %v457 = vcombine.high %v455, %v455
    %s462 = scalar_lea.vmem [#allocation7], 2
    %463 = vst.msk [vmem:[%s462] ss:$8 sm:$0x3] %vm268, %v448
    %464 = vst.msk [vmem:[%s462] ss:$8 sm:$0x0] %vm268, %v448
    %s465 = scalar_lea.vmem [#allocation7], 34
    %466 = vst.msk [vmem:[%s465] ss:$8 sm:$0x3] %vm268, %v455
    %467 = vst.msk [vmem:[%s465] ss:$8 sm:$0x0] %vm268, %v455
    %s468 = scalar_lea.vmem [#allocation7], 66
    %469 = vst.msk [vmem:[%s468] ss:$8 sm:$0x3] %vm268, %v456
    %470 = vst.msk [vmem:[%s468] ss:$8 sm:$0x0] %vm268, %v456
    %s471 = scalar_lea.vmem [#allocation7], 98
    %472 = vst.msk [vmem:[%s471] ss:$8 sm:$0x3] %vm268, %v457
    %473 = vst.msk [vmem:[%s471] ss:$8 sm:$0x0] %vm268, %v457
    %s474 = sld [smem:[#allocation2 + $0x180]]
    %v475 = vstv %s474
    %v476 = vmul.f32 %v59, %v475
    %v477 = vmul.f32 %v60, %v475
    %s478 = sld [smem:[#allocation2 + $0x181]]
    %v479 = vstv %s478
    %v480 = vmul.f32 %v76, %v479
    %v481 = vmul.f32 %v77, %v479
    %v482 = vadd.f32 %v476, %v480
    %v483 = vadd.f32 %v477, %v481
    %s484 = sld [smem:[#allocation2 + $0x182]]
    %v485 = vstv %s484
    %v486 = vmul.f32 %v93, %v485
    %v487 = vmul.f32 %v94, %v485
    %v488 = vadd.f32 %v482, %v486
    %v489 = vadd.f32 %v483, %v487
    %s490 = sld [smem:[#allocation2 + $0x183]]
    %v491 = vstv %s490
    %v492 = vmul.f32 %v110, %v491
    %v493 = vmul.f32 %v111, %v491
    %v494 = vadd.f32 %v488, %v492
    %v495 = vadd.f32 %v489, %v493
    %s496 = sld [smem:[#allocation2 + $0x184]]
    %v497 = vstv %s496
    %v498 = vmul.f32 %v37, %v497
    %v500 = vcombine.high %v498, %v498
    %v502 = vadd.f32 %v494, %v498
    %v503 = vadd.f32 %v495, %v500
    %s504 = sld [smem:[#allocation2 + $0x185]]
    %v505 = vstv %s504
    %v506 = vmul.f32 %v127, %v505
    %v507 = vmul.f32 %v128, %v505
    %v508 = vadd.f32 %v502, %v506
    %v509 = vadd.f32 %v503, %v507
    %s510 = sld [smem:[#allocation2 + $0x186]]
    %v511 = vstv %s510
    %v512 = vmul.f32 %v144, %v511
    %v513 = vmul.f32 %v145, %v511
    %v514 = vadd.f32 %v508, %v512
    %v515 = vadd.f32 %v509, %v513
    %s516 = sld [smem:[#allocation2 + $0x187]]
    %v517 = vstv %s516
    %v518 = vmul.f32 %v161, %v517
    %v519 = vmul.f32 %v162, %v517
    %v520 = vadd.f32 %v514, %v518
    %v521 = vadd.f32 %v515, %v519
    %s522 = sld [smem:[#allocation2 + $0x188]]
    %v523 = vstv %s522
    %v524 = vmul.f32 %v178, %v523
    %v525 = vmul.f32 %v179, %v523
    %v526 = vadd.f32 %v520, %v524
    %v527 = vadd.f32 %v521, %v525
    %v530 = vcombine.low %v526, %v527
    %v532 = vunpack.c.l.s4 1966171168
    %v533 = vunpack.c.0.s8 %v532
    %v534 = vlaneseq
    %v535 = vshrl.u32 %v534, 7
    %v536 = vsub.s32 %v533, %v535
    %v537 = vrot.slane %v530, %v536
    %v538 = vcombine.high %v537, %v537
    %v540 = vunpack.c.l.s4 1966171168
    %v541 = vunpack.c.0.s8 %v540
    %v542 = vlaneseq
    %v543 = vshrl.u32 %v542, 7
    %v544 = vsub.s32 %v541, %v543
    %v545 = vrot.slane %v537, %v544
    %v547 = vunpack.c.l.s4 1966171168
    %v548 = vunpack.c.0.s8 %v547
    %v549 = vlaneseq
    %v550 = vshrl.u32 %v549, 7
    %v551 = vsub.s32 %v548, %v550
    %v552 = vrot.slane %v538, %v551
    %v553 = vcombine.high %v545, %v545
    %v554 = vcombine.high %v552, %v552
    %s559 = scalar_lea.vmem [#allocation7], 3
    %560 = vst.msk [vmem:[%s559] ss:$8 sm:$0x3] %vm268, %v545
    %561 = vst.msk [vmem:[%s559] ss:$8 sm:$0x0] %vm268, %v545
    %s562 = scalar_lea.vmem [#allocation7], 35
    %563 = vst.msk [vmem:[%s562] ss:$8 sm:$0x3] %vm268, %v552
    %564 = vst.msk [vmem:[%s562] ss:$8 sm:$0x0] %vm268, %v552
    %s565 = scalar_lea.vmem [#allocation7], 67
    %566 = vst.msk [vmem:[%s565] ss:$8 sm:$0x3] %vm268, %v553
    %567 = vst.msk [vmem:[%s565] ss:$8 sm:$0x0] %vm268, %v553
    %s568 = scalar_lea.vmem [#allocation7], 99
    %569 = vst.msk [vmem:[%s568] ss:$8 sm:$0x3] %vm268, %v554
    %570 = vst.msk [vmem:[%s568] ss:$8 sm:$0x0] %vm268, %v554
    %s571 = sld [smem:[#allocation2 + $0x200]]
    %v572 = vstv %s571
    %v573 = vmul.f32 %v59, %v572
    %v574 = vmul.f32 %v60, %v572
    %s575 = sld [smem:[#allocation2 + $0x201]]
    %v576 = vstv %s575
    %v577 = vmul.f32 %v76, %v576
    %v578 = vmul.f32 %v77, %v576
    %v579 = vadd.f32 %v573, %v577
    %v580 = vadd.f32 %v574, %v578
    %s581 = sld [smem:[#allocation2 + $0x202]]
    %v582 = vstv %s581
    %v583 = vmul.f32 %v93, %v582
    %v584 = vmul.f32 %v94, %v582
    %v585 = vadd.f32 %v579, %v583
    %v586 = vadd.f32 %v580, %v584
    %s587 = sld [smem:[#allocation2 + $0x203]]
    %v588 = vstv %s587
    %v589 = vmul.f32 %v110, %v588
    %v590 = vmul.f32 %v111, %v588
    %v591 = vadd.f32 %v585, %v589
    %v592 = vadd.f32 %v586, %v590
    %s593 = sld [smem:[#allocation2 + $0x204]]
    %v594 = vstv %s593
    %v595 = vmul.f32 %v37, %v594
    %v597 = vcombine.high %v595, %v595
    %v599 = vadd.f32 %v591, %v595
    %v600 = vadd.f32 %v592, %v597
    %s601 = sld [smem:[#allocation2 + $0x205]]
    %v602 = vstv %s601
    %v603 = vmul.f32 %v127, %v602
    %v604 = vmul.f32 %v128, %v602
    %v605 = vadd.f32 %v599, %v603
    %v606 = vadd.f32 %v600, %v604
    %s607 = sld [smem:[#allocation2 + $0x206]]
    %v608 = vstv %s607
    %v609 = vmul.f32 %v144, %v608
    %v610 = vmul.f32 %v145, %v608
    %v611 = vadd.f32 %v605, %v609
    %v612 = vadd.f32 %v606, %v610
    %s613 = sld [smem:[#allocation2 + $0x207]]
    %v614 = vstv %s613
    %v615 = vmul.f32 %v161, %v614
    %v616 = vmul.f32 %v162, %v614
    %v617 = vadd.f32 %v611, %v615
    %v618 = vadd.f32 %v612, %v616
    %s619 = sld [smem:[#allocation2 + $0x208]]
    %v620 = vstv %s619
    %v621 = vmul.f32 %v178, %v620
    %v622 = vmul.f32 %v179, %v620
    %v623 = vadd.f32 %v617, %v621
    %v624 = vadd.f32 %v618, %v622
    %v627 = vcombine.low %v623, %v624
    %v629 = vunpack.c.l.s4 1966171168
    %v630 = vunpack.c.0.s8 %v629
    %v631 = vlaneseq
    %v632 = vshrl.u32 %v631, 7
    %v633 = vsub.s32 %v630, %v632
    %v634 = vrot.slane %v627, %v633
    %v635 = vcombine.high %v634, %v634
    %v637 = vunpack.c.l.s4 1966171168
    %v638 = vunpack.c.0.s8 %v637
    %v639 = vlaneseq
    %v640 = vshrl.u32 %v639, 7
    %v641 = vsub.s32 %v638, %v640
    %v642 = vrot.slane %v634, %v641
    %v644 = vunpack.c.l.s4 1966171168
    %v645 = vunpack.c.0.s8 %v644
    %v646 = vlaneseq
    %v647 = vshrl.u32 %v646, 7
    %v648 = vsub.s32 %v645, %v647
    %v649 = vrot.slane %v635, %v648
    %v650 = vcombine.high %v642, %v642
    %v651 = vcombine.high %v649, %v649
    %s656 = scalar_lea.vmem [#allocation7], 4
    %657 = vst.msk [vmem:[%s656] ss:$8 sm:$0x3] %vm268, %v642
    %658 = vst.msk [vmem:[%s656] ss:$8 sm:$0x0] %vm268, %v642
    %s659 = scalar_lea.vmem [#allocation7], 36
    %660 = vst.msk [vmem:[%s659] ss:$8 sm:$0x3] %vm268, %v649
    %661 = vst.msk [vmem:[%s659] ss:$8 sm:$0x0] %vm268, %v649
    %s662 = scalar_lea.vmem [#allocation7], 68
    %663 = vst.msk [vmem:[%s662] ss:$8 sm:$0x3] %vm268, %v650
    %664 = vst.msk [vmem:[%s662] ss:$8 sm:$0x0] %vm268, %v650
    %s665 = scalar_lea.vmem [#allocation7], 100
    %666 = vst.msk [vmem:[%s665] ss:$8 sm:$0x3] %vm268, %v651
    %667 = vst.msk [vmem:[%s665] ss:$8 sm:$0x0] %vm268, %v651
    %s668 = sld [smem:[#allocation2 + $0x280]]
    %v669 = vstv %s668
    %v670 = vmul.f32 %v59, %v669
    %v671 = vmul.f32 %v60, %v669
    %s672 = sld [smem:[#allocation2 + $0x281]]
    %v673 = vstv %s672
    %v674 = vmul.f32 %v76, %v673
    %v675 = vmul.f32 %v77, %v673
    %v676 = vadd.f32 %v670, %v674
    %v677 = vadd.f32 %v671, %v675
    %s678 = sld [smem:[#allocation2 + $0x282]]
    %v679 = vstv %s678
    %v680 = vmul.f32 %v93, %v679
    %v681 = vmul.f32 %v94, %v679
    %v682 = vadd.f32 %v676, %v680
    %v683 = vadd.f32 %v677, %v681
    %s684 = sld [smem:[#allocation2 + $0x283]]
    %v685 = vstv %s684
    %v686 = vmul.f32 %v110, %v685
    %v687 = vmul.f32 %v111, %v685
    %v688 = vadd.f32 %v682, %v686
    %v689 = vadd.f32 %v683, %v687
    %s690 = sld [smem:[#allocation2 + $0x284]]
    %v691 = vstv %s690
    %v692 = vmul.f32 %v37, %v691
    %v694 = vcombine.high %v692, %v692
    %v696 = vadd.f32 %v688, %v692
    %v697 = vadd.f32 %v689, %v694
    %s698 = sld [smem:[#allocation2 + $0x285]]
    %v699 = vstv %s698
    %v700 = vmul.f32 %v127, %v699
    %v701 = vmul.f32 %v128, %v699
    %v702 = vadd.f32 %v696, %v700
    %v703 = vadd.f32 %v697, %v701
    %s704 = sld [smem:[#allocation2 + $0x286]]
    %v705 = vstv %s704
    %v706 = vmul.f32 %v144, %v705
    %v707 = vmul.f32 %v145, %v705
    %v708 = vadd.f32 %v702, %v706
    %v709 = vadd.f32 %v703, %v707
    %s710 = sld [smem:[#allocation2 + $0x287]]
    %v711 = vstv %s710
    %v712 = vmul.f32 %v161, %v711
    %v713 = vmul.f32 %v162, %v711
    %v714 = vadd.f32 %v708, %v712
    %v715 = vadd.f32 %v709, %v713
    %s716 = sld [smem:[#allocation2 + $0x288]]
    %v717 = vstv %s716
    %v718 = vmul.f32 %v178, %v717
    %v719 = vmul.f32 %v179, %v717
    %v720 = vadd.f32 %v714, %v718
    %v721 = vadd.f32 %v715, %v719
    %v724 = vcombine.low %v720, %v721
    %v726 = vunpack.c.l.s4 1966171168
    %v727 = vunpack.c.0.s8 %v726
    %v728 = vlaneseq
    %v729 = vshrl.u32 %v728, 7
    %v730 = vsub.s32 %v727, %v729
    %v731 = vrot.slane %v724, %v730
    %v732 = vcombine.high %v731, %v731
    %v734 = vunpack.c.l.s4 1966171168
    %v735 = vunpack.c.0.s8 %v734
    %v736 = vlaneseq
    %v737 = vshrl.u32 %v736, 7
    %v738 = vsub.s32 %v735, %v737
    %v739 = vrot.slane %v731, %v738
    %v741 = vunpack.c.l.s4 1966171168
    %v742 = vunpack.c.0.s8 %v741
    %v743 = vlaneseq
    %v744 = vshrl.u32 %v743, 7
    %v745 = vsub.s32 %v742, %v744
    %v746 = vrot.slane %v732, %v745
    %v747 = vcombine.high %v739, %v739
    %v748 = vcombine.high %v746, %v746
    %s753 = scalar_lea.vmem [#allocation7], 5
    %754 = vst.msk [vmem:[%s753] ss:$8 sm:$0x3] %vm268, %v739
    %755 = vst.msk [vmem:[%s753] ss:$8 sm:$0x0] %vm268, %v739
    %s756 = scalar_lea.vmem [#allocation7], 37
    %757 = vst.msk [vmem:[%s756] ss:$8 sm:$0x3] %vm268, %v746
    %758 = vst.msk [vmem:[%s756] ss:$8 sm:$0x0] %vm268, %v746
    %s759 = scalar_lea.vmem [#allocation7], 69
    %760 = vst.msk [vmem:[%s759] ss:$8 sm:$0x3] %vm268, %v747
    %761 = vst.msk [vmem:[%s759] ss:$8 sm:$0x0] %vm268, %v747
    %s762 = scalar_lea.vmem [#allocation7], 101
    %763 = vst.msk [vmem:[%s762] ss:$8 sm:$0x3] %vm268, %v748
    %764 = vst.msk [vmem:[%s762] ss:$8 sm:$0x0] %vm268, %v748
    %s765 = sld [smem:[#allocation2 + $0x300]]
    %v766 = vstv %s765
    %v767 = vmul.f32 %v59, %v766
    %v768 = vmul.f32 %v60, %v766
    %s769 = sld [smem:[#allocation2 + $0x301]]
    %v770 = vstv %s769
    %v771 = vmul.f32 %v76, %v770
    %v772 = vmul.f32 %v77, %v770
    %v773 = vadd.f32 %v767, %v771
    %v774 = vadd.f32 %v768, %v772
    %s775 = sld [smem:[#allocation2 + $0x302]]
    %v776 = vstv %s775
    %v777 = vmul.f32 %v93, %v776
    %v778 = vmul.f32 %v94, %v776
    %v779 = vadd.f32 %v773, %v777
    %v780 = vadd.f32 %v774, %v778
    %s781 = sld [smem:[#allocation2 + $0x303]]
    %v782 = vstv %s781
    %v783 = vmul.f32 %v110, %v782
    %v784 = vmul.f32 %v111, %v782
    %v785 = vadd.f32 %v779, %v783
    %v786 = vadd.f32 %v780, %v784
    %s787 = sld [smem:[#allocation2 + $0x304]]
    %v788 = vstv %s787
    %v789 = vmul.f32 %v37, %v788
    %v791 = vcombine.high %v789, %v789
    %v793 = vadd.f32 %v785, %v789
    %v794 = vadd.f32 %v786, %v791
    %s795 = sld [smem:[#allocation2 + $0x305]]
    %v796 = vstv %s795
    %v797 = vmul.f32 %v127, %v796
    %v798 = vmul.f32 %v128, %v796
    %v799 = vadd.f32 %v793, %v797
    %v800 = vadd.f32 %v794, %v798
    %s801 = sld [smem:[#allocation2 + $0x306]]
    %v802 = vstv %s801
    %v803 = vmul.f32 %v144, %v802
    %v804 = vmul.f32 %v145, %v802
    %v805 = vadd.f32 %v799, %v803
    %v806 = vadd.f32 %v800, %v804
    %s807 = sld [smem:[#allocation2 + $0x307]]
    %v808 = vstv %s807
    %v809 = vmul.f32 %v161, %v808
    %v810 = vmul.f32 %v162, %v808
    %v811 = vadd.f32 %v805, %v809
    %v812 = vadd.f32 %v806, %v810
    %s813 = sld [smem:[#allocation2 + $0x308]]
    %v814 = vstv %s813
    %v815 = vmul.f32 %v178, %v814
    %v816 = vmul.f32 %v179, %v814
    %v817 = vadd.f32 %v811, %v815
    %v818 = vadd.f32 %v812, %v816
    %v821 = vcombine.low %v817, %v818
    %v823 = vunpack.c.l.s4 1966171168
    %v824 = vunpack.c.0.s8 %v823
    %v825 = vlaneseq
    %v826 = vshrl.u32 %v825, 7
    %v827 = vsub.s32 %v824, %v826
    %v828 = vrot.slane %v821, %v827
    %v829 = vcombine.high %v828, %v828
    %v831 = vunpack.c.l.s4 1966171168
    %v832 = vunpack.c.0.s8 %v831
    %v833 = vlaneseq
    %v834 = vshrl.u32 %v833, 7
    %v835 = vsub.s32 %v832, %v834
    %v836 = vrot.slane %v828, %v835
    %v838 = vunpack.c.l.s4 1966171168
    %v839 = vunpack.c.0.s8 %v838
    %v840 = vlaneseq
    %v841 = vshrl.u32 %v840, 7
    %v842 = vsub.s32 %v839, %v841
    %v843 = vrot.slane %v829, %v842
    %v844 = vcombine.high %v836, %v836
    %v845 = vcombine.high %v843, %v843
    %s850 = scalar_lea.vmem [#allocation7], 6
    %851 = vst.msk [vmem:[%s850] ss:$8 sm:$0x3] %vm268, %v836
    %852 = vst.msk [vmem:[%s850] ss:$8 sm:$0x0] %vm268, %v836
    %s853 = scalar_lea.vmem [#allocation7], 38
    %854 = vst.msk [vmem:[%s853] ss:$8 sm:$0x3] %vm268, %v843
    %855 = vst.msk [vmem:[%s853] ss:$8 sm:$0x0] %vm268, %v843
    %s856 = scalar_lea.vmem [#allocation7], 70
    %857 = vst.msk [vmem:[%s856] ss:$8 sm:$0x3] %vm268, %v844
    %858 = vst.msk [vmem:[%s856] ss:$8 sm:$0x0] %vm268, %v844
    %s859 = scalar_lea.vmem [#allocation7], 102
    %860 = vst.msk [vmem:[%s859] ss:$8 sm:$0x3] %vm268, %v845
    %861 = vst.msk [vmem:[%s859] ss:$8 sm:$0x0] %vm268, %v845
    %s862 = sld [smem:[#allocation2 + $0x380]]
    %v863 = vstv %s862
    %v864 = vmul.f32 %v59, %v863
    %v865 = vmul.f32 %v60, %v863
    %s866 = sld [smem:[#allocation2 + $0x381]]
    %v867 = vstv %s866
    %v868 = vmul.f32 %v76, %v867
    %v869 = vmul.f32 %v77, %v867
    %v870 = vadd.f32 %v864, %v868
    %v871 = vadd.f32 %v865, %v869
    %s872 = sld [smem:[#allocation2 + $0x382]]
    %v873 = vstv %s872
    %v874 = vmul.f32 %v93, %v873
    %v875 = vmul.f32 %v94, %v873
    %v876 = vadd.f32 %v870, %v874
    %v877 = vadd.f32 %v871, %v875
    %s878 = sld [smem:[#allocation2 + $0x383]]
    %v879 = vstv %s878
    %v880 = vmul.f32 %v110, %v879
    %v881 = vmul.f32 %v111, %v879
    %v882 = vadd.f32 %v876, %v880
    %v883 = vadd.f32 %v877, %v881
    %s884 = sld [smem:[#allocation2 + $0x384]]
    %v885 = vstv %s884
    %v886 = vmul.f32 %v37, %v885
    %v888 = vcombine.high %v886, %v886
    %v890 = vadd.f32 %v882, %v886
    %v891 = vadd.f32 %v883, %v888
    %s892 = sld [smem:[#allocation2 + $0x385]]
    %v893 = vstv %s892
    %v894 = vmul.f32 %v127, %v893
    %v895 = vmul.f32 %v128, %v893
    %v896 = vadd.f32 %v890, %v894
    %v897 = vadd.f32 %v891, %v895
    %s898 = sld [smem:[#allocation2 + $0x386]]
    %v899 = vstv %s898
    %v900 = vmul.f32 %v144, %v899
    %v901 = vmul.f32 %v145, %v899
    %v902 = vadd.f32 %v896, %v900
    %v903 = vadd.f32 %v897, %v901
    %s904 = sld [smem:[#allocation2 + $0x387]]
    %v905 = vstv %s904
    %v906 = vmul.f32 %v161, %v905
    %v907 = vmul.f32 %v162, %v905
    %v908 = vadd.f32 %v902, %v906
    %v909 = vadd.f32 %v903, %v907
    %s910 = sld [smem:[#allocation2 + $0x388]]
    %v911 = vstv %s910
    %v912 = vmul.f32 %v178, %v911
    %v913 = vmul.f32 %v179, %v911
    %v914 = vadd.f32 %v908, %v912
    %v915 = vadd.f32 %v909, %v913
    %v918 = vcombine.low %v914, %v915
    %v920 = vunpack.c.l.s4 1966171168
    %v921 = vunpack.c.0.s8 %v920
    %v922 = vlaneseq
    %v923 = vshrl.u32 %v922, 7
    %v924 = vsub.s32 %v921, %v923
    %v925 = vrot.slane %v918, %v924
    %v926 = vcombine.high %v925, %v925
    %v928 = vunpack.c.l.s4 1966171168
    %v929 = vunpack.c.0.s8 %v928
    %v930 = vlaneseq
    %v931 = vshrl.u32 %v930, 7
    %v932 = vsub.s32 %v929, %v931
    %v933 = vrot.slane %v925, %v932
    %v935 = vunpack.c.l.s4 1966171168
    %v936 = vunpack.c.0.s8 %v935
    %v937 = vlaneseq
    %v938 = vshrl.u32 %v937, 7
    %v939 = vsub.s32 %v936, %v938
    %v940 = vrot.slane %v926, %v939
    %v941 = vcombine.high %v933, %v933
    %v942 = vcombine.high %v940, %v940
    %s947 = scalar_lea.vmem [#allocation7], 7
    %948 = vst.msk [vmem:[%s947] ss:$8 sm:$0x3] %vm268, %v933
    %949 = vst.msk [vmem:[%s947] ss:$8 sm:$0x0] %vm268, %v933
    %s950 = scalar_lea.vmem [#allocation7], 39
    %951 = vst.msk [vmem:[%s950] ss:$8 sm:$0x3] %vm268, %v940
    %952 = vst.msk [vmem:[%s950] ss:$8 sm:$0x0] %vm268, %v940
    %s953 = scalar_lea.vmem [#allocation7], 71
    %954 = vst.msk [vmem:[%s953] ss:$8 sm:$0x3] %vm268, %v941
    %955 = vst.msk [vmem:[%s953] ss:$8 sm:$0x0] %vm268, %v941
    %s956 = scalar_lea.vmem [#allocation7], 103
    %957 = vst.msk [vmem:[%s956] ss:$8 sm:$0x3] %vm268, %v942
    %958 = vst.msk [vmem:[%s956] ss:$8 sm:$0x0] %vm268, %v942
    %s959 = sld [smem:[#allocation2 + $0x400]]
    %v960 = vstv %s959
    %v961 = vmul.f32 %v59, %v960
    %v962 = vmul.f32 %v60, %v960
    %s963 = sld [smem:[#allocation2 + $0x401]]
    %v964 = vstv %s963
    %v965 = vmul.f32 %v76, %v964
    %v966 = vmul.f32 %v77, %v964
    %v967 = vadd.f32 %v961, %v965
    %v968 = vadd.f32 %v962, %v966
    %s969 = sld [smem:[#allocation2 + $0x402]]
    %v970 = vstv %s969
    %v971 = vmul.f32 %v93, %v970
    %v972 = vmul.f32 %v94, %v970
    %v973 = vadd.f32 %v967, %v971
    %v974 = vadd.f32 %v968, %v972
    %s975 = sld [smem:[#allocation2 + $0x403]]
    %v976 = vstv %s975
    %v977 = vmul.f32 %v110, %v976
    %v978 = vmul.f32 %v111, %v976
    %v979 = vadd.f32 %v973, %v977
    %v980 = vadd.f32 %v974, %v978
    %s981 = sld [smem:[#allocation2 + $0x404]]
    %v982 = vstv %s981
    %v983 = vmul.f32 %v37, %v982
    %v985 = vcombine.high %v983, %v983
    %v987 = vadd.f32 %v979, %v983
    %v988 = vadd.f32 %v980, %v985
    %s989 = sld [smem:[#allocation2 + $0x405]]
    %v990 = vstv %s989
    %v991 = vmul.f32 %v127, %v990
    %v992 = vmul.f32 %v128, %v990
    %v993 = vadd.f32 %v987, %v991
    %v994 = vadd.f32 %v988, %v992
    %s995 = sld [smem:[#allocation2 + $0x406]]
    %v996 = vstv %s995
    %v997 = vmul.f32 %v144, %v996
    %v998 = vmul.f32 %v145, %v996
    %v999 = vadd.f32 %v993, %v997
    %v1000 = vadd.f32 %v994, %v998
    %s1001 = sld [smem:[#allocation2 + $0x407]]
    %v1002 = vstv %s1001
    %v1003 = vmul.f32 %v161, %v1002
    %v1004 = vmul.f32 %v162, %v1002
    %v1005 = vadd.f32 %v999, %v1003
    %v1006 = vadd.f32 %v1000, %v1004
    %s1007 = sld [smem:[#allocation2 + $0x408]]
    %v1008 = vstv %s1007
    %v1009 = vmul.f32 %v178, %v1008
    %v1010 = vmul.f32 %v179, %v1008
    %v1011 = vadd.f32 %v1005, %v1009
    %v1012 = vadd.f32 %v1006, %v1010
    %v1015 = vcombine.low %v1011, %v1012
    %v1017 = vunpack.c.l.s4 1966171168
    %v1018 = vunpack.c.0.s8 %v1017
    %v1019 = vlaneseq
    %v1020 = vshrl.u32 %v1019, 7
    %v1021 = vsub.s32 %v1018, %v1020
    %v1022 = vrot.slane %v1015, %v1021
    %v1023 = vcombine.high %v1022, %v1022
    %v1025 = vunpack.c.l.s4 1966171168
    %v1026 = vunpack.c.0.s8 %v1025
    %v1027 = vlaneseq
    %v1028 = vshrl.u32 %v1027, 7
    %v1029 = vsub.s32 %v1026, %v1028
    %v1030 = vrot.slane %v1022, %v1029
    %v1032 = vunpack.c.l.s4 1966171168
    %v1033 = vunpack.c.0.s8 %v1032
    %v1034 = vlaneseq
    %v1035 = vshrl.u32 %v1034, 7
    %v1036 = vsub.s32 %v1033, %v1035
    %v1037 = vrot.slane %v1023, %v1036
    %v1038 = vcombine.high %v1030, %v1030
    %v1039 = vcombine.high %v1037, %v1037
    %s1044 = scalar_lea.vmem [#allocation7], 16
    %1045 = vst.msk [vmem:[%s1044] ss:$8 sm:$0x3] %vm268, %v1030
    %1046 = vst.msk [vmem:[%s1044] ss:$8 sm:$0x0] %vm268, %v1030
    %s1047 = scalar_lea.vmem [#allocation7], 48
    %1048 = vst.msk [vmem:[%s1047] ss:$8 sm:$0x3] %vm268, %v1037
    %1049 = vst.msk [vmem:[%s1047] ss:$8 sm:$0x0] %vm268, %v1037
    %s1050 = scalar_lea.vmem [#allocation7], 80
    %1051 = vst.msk [vmem:[%s1050] ss:$8 sm:$0x3] %vm268, %v1038
    %1052 = vst.msk [vmem:[%s1050] ss:$8 sm:$0x0] %vm268, %v1038
    %s1053 = scalar_lea.vmem [#allocation7], 112
    %1054 = vst.msk [vmem:[%s1053] ss:$8 sm:$0x3] %vm268, %v1039
    %1055 = vst.msk [vmem:[%s1053] ss:$8 sm:$0x0] %vm268, %v1039
    %s1056 = sld [smem:[#allocation2 + $0x480]]
    %v1057 = vstv %s1056
    %v1058 = vmul.f32 %v59, %v1057
    %v1059 = vmul.f32 %v60, %v1057
    %s1060 = sld [smem:[#allocation2 + $0x481]]
    %v1061 = vstv %s1060
    %v1062 = vmul.f32 %v76, %v1061
    %v1063 = vmul.f32 %v77, %v1061
    %v1064 = vadd.f32 %v1058, %v1062
    %v1065 = vadd.f32 %v1059, %v1063
    %s1066 = sld [smem:[#allocation2 + $0x482]]
    %v1067 = vstv %s1066
    %v1068 = vmul.f32 %v93, %v1067
    %v1069 = vmul.f32 %v94, %v1067
    %v1070 = vadd.f32 %v1064, %v1068
    %v1071 = vadd.f32 %v1065, %v1069
    %s1072 = sld [smem:[#allocation2 + $0x483]]
    %v1073 = vstv %s1072
    %v1074 = vmul.f32 %v110, %v1073
    %v1075 = vmul.f32 %v111, %v1073
    %v1076 = vadd.f32 %v1070, %v1074
    %v1077 = vadd.f32 %v1071, %v1075
    %s1078 = sld [smem:[#allocation2 + $0x484]]
    %v1079 = vstv %s1078
    %v1080 = vmul.f32 %v37, %v1079
    %v1082 = vcombine.high %v1080, %v1080
    %v1084 = vadd.f32 %v1076, %v1080
    %v1085 = vadd.f32 %v1077, %v1082
    %s1086 = sld [smem:[#allocation2 + $0x485]]
    %v1087 = vstv %s1086
    %v1088 = vmul.f32 %v127, %v1087
    %v1089 = vmul.f32 %v128, %v1087
    %v1090 = vadd.f32 %v1084, %v1088
    %v1091 = vadd.f32 %v1085, %v1089
    %s1092 = sld [smem:[#allocation2 + $0x486]]
    %v1093 = vstv %s1092
    %v1094 = vmul.f32 %v144, %v1093
    %v1095 = vmul.f32 %v145, %v1093
    %v1096 = vadd.f32 %v1090, %v1094
    %v1097 = vadd.f32 %v1091, %v1095
    %s1098 = sld [smem:[#allocation2 + $0x487]]
    %v1099 = vstv %s1098
    %v1100 = vmul.f32 %v161, %v1099
    %v1101 = vmul.f32 %v162, %v1099
    %v1102 = vadd.f32 %v1096, %v1100
    %v1103 = vadd.f32 %v1097, %v1101
    %s1104 = sld [smem:[#allocation2 + $0x488]]
    %v1105 = vstv %s1104
    %v1106 = vmul.f32 %v178, %v1105
    %v1107 = vmul.f32 %v179, %v1105
    %v1108 = vadd.f32 %v1102, %v1106
    %v1109 = vadd.f32 %v1103, %v1107
    %v1112 = vcombine.low %v1108, %v1109
    %v1114 = vunpack.c.l.s4 1966171168
    %v1115 = vunpack.c.0.s8 %v1114
    %v1116 = vlaneseq
    %v1117 = vshrl.u32 %v1116, 7
    %v1118 = vsub.s32 %v1115, %v1117
    %v1119 = vrot.slane %v1112, %v1118
    %v1120 = vcombine.high %v1119, %v1119
    %v1122 = vunpack.c.l.s4 1966171168
    %v1123 = vunpack.c.0.s8 %v1122
    %v1124 = vlaneseq
    %v1125 = vshrl.u32 %v1124, 7
    %v1126 = vsub.s32 %v1123, %v1125
    %v1127 = vrot.slane %v1119, %v1126
    %v1129 = vunpack.c.l.s4 1966171168
    %v1130 = vunpack.c.0.s8 %v1129
    %v1131 = vlaneseq
    %v1132 = vshrl.u32 %v1131, 7
    %v1133 = vsub.s32 %v1130, %v1132
    %v1134 = vrot.slane %v1120, %v1133
    %v1135 = vcombine.high %v1127, %v1127
    %v1136 = vcombine.high %v1134, %v1134
    %s1141 = scalar_lea.vmem [#allocation7], 17
    %1142 = vst.msk [vmem:[%s1141] ss:$8 sm:$0x3] %vm268, %v1127
    %1143 = vst.msk [vmem:[%s1141] ss:$8 sm:$0x0] %vm268, %v1127
    %s1144 = scalar_lea.vmem [#allocation7], 49
    %1145 = vst.msk [vmem:[%s1144] ss:$8 sm:$0x3] %vm268, %v1134
    %1146 = vst.msk [vmem:[%s1144] ss:$8 sm:$0x0] %vm268, %v1134
    %s1147 = scalar_lea.vmem [#allocation7], 81
    %1148 = vst.msk [vmem:[%s1147] ss:$8 sm:$0x3] %vm268, %v1135
    %1149 = vst.msk [vmem:[%s1147] ss:$8 sm:$0x0] %vm268, %v1135
    %s1150 = scalar_lea.vmem [#allocation7], 113
    %1151 = vst.msk [vmem:[%s1150] ss:$8 sm:$0x3] %vm268, %v1136
    %1152 = vst.msk [vmem:[%s1150] ss:$8 sm:$0x0] %vm268, %v1136
    %s1153 = sld [smem:[#allocation2 + $0x500]]
    %v1154 = vstv %s1153
    %v1155 = vmul.f32 %v59, %v1154
    %v1156 = vmul.f32 %v60, %v1154
    %s1157 = sld [smem:[#allocation2 + $0x501]]
    %v1158 = vstv %s1157
    %v1159 = vmul.f32 %v76, %v1158
    %v1160 = vmul.f32 %v77, %v1158
    %v1161 = vadd.f32 %v1155, %v1159
    %v1162 = vadd.f32 %v1156, %v1160
    %s1163 = sld [smem:[#allocation2 + $0x502]]
    %v1164 = vstv %s1163
    %v1165 = vmul.f32 %v93, %v1164
    %v1166 = vmul.f32 %v94, %v1164
    %v1167 = vadd.f32 %v1161, %v1165
    %v1168 = vadd.f32 %v1162, %v1166
    %s1169 = sld [smem:[#allocation2 + $0x503]]
    %v1170 = vstv %s1169
    %v1171 = vmul.f32 %v110, %v1170
    %v1172 = vmul.f32 %v111, %v1170
    %v1173 = vadd.f32 %v1167, %v1171
    %v1174 = vadd.f32 %v1168, %v1172
    %s1175 = sld [smem:[#allocation2 + $0x504]]
    %v1176 = vstv %s1175
    %v1177 = vmul.f32 %v37, %v1176
    %v1179 = vcombine.high %v1177, %v1177
    %v1181 = vadd.f32 %v1173, %v1177
    %v1182 = vadd.f32 %v1174, %v1179
    %s1183 = sld [smem:[#allocation2 + $0x505]]
    %v1184 = vstv %s1183
    %v1185 = vmul.f32 %v127, %v1184
    %v1186 = vmul.f32 %v128, %v1184
    %v1187 = vadd.f32 %v1181, %v1185
    %v1188 = vadd.f32 %v1182, %v1186
    %s1189 = sld [smem:[#allocation2 + $0x506]]
    %v1190 = vstv %s1189
    %v1191 = vmul.f32 %v144, %v1190
    %v1192 = vmul.f32 %v145, %v1190
    %v1193 = vadd.f32 %v1187, %v1191
    %v1194 = vadd.f32 %v1188, %v1192
    %s1195 = sld [smem:[#allocation2 + $0x507]]
    %v1196 = vstv %s1195
    %v1197 = vmul.f32 %v161, %v1196
    %v1198 = vmul.f32 %v162, %v1196
    %v1199 = vadd.f32 %v1193, %v1197
    %v1200 = vadd.f32 %v1194, %v1198
    %s1201 = sld [smem:[#allocation2 + $0x508]]
    %v1202 = vstv %s1201
    %v1203 = vmul.f32 %v178, %v1202
    %v1204 = vmul.f32 %v179, %v1202
    %v1205 = vadd.f32 %v1199, %v1203
    %v1206 = vadd.f32 %v1200, %v1204
    %v1209 = vcombine.low %v1205, %v1206
    %v1211 = vunpack.c.l.s4 1966171168
    %v1212 = vunpack.c.0.s8 %v1211
    %v1213 = vlaneseq
    %v1214 = vshrl.u32 %v1213, 7
    %v1215 = vsub.s32 %v1212, %v1214
    %v1216 = vrot.slane %v1209, %v1215
    %v1217 = vcombine.high %v1216, %v1216
    %v1219 = vunpack.c.l.s4 1966171168
    %v1220 = vunpack.c.0.s8 %v1219
    %v1221 = vlaneseq
    %v1222 = vshrl.u32 %v1221, 7
    %v1223 = vsub.s32 %v1220, %v1222
    %v1224 = vrot.slane %v1216, %v1223
    %v1226 = vunpack.c.l.s4 1966171168
    %v1227 = vunpack.c.0.s8 %v1226
    %v1228 = vlaneseq
    %v1229 = vshrl.u32 %v1228, 7
    %v1230 = vsub.s32 %v1227, %v1229
    %v1231 = vrot.slane %v1217, %v1230
    %v1232 = vcombine.high %v1224, %v1224
    %v1233 = vcombine.high %v1231, %v1231
    %s1238 = scalar_lea.vmem [#allocation7], 18
    %1239 = vst.msk [vmem:[%s1238] ss:$8 sm:$0x3] %vm268, %v1224
    %1240 = vst.msk [vmem:[%s1238] ss:$8 sm:$0x0] %vm268, %v1224
    %s1241 = scalar_lea.vmem [#allocation7], 50
    %1242 = vst.msk [vmem:[%s1241] ss:$8 sm:$0x3] %vm268, %v1231
    %1243 = vst.msk [vmem:[%s1241] ss:$8 sm:$0x0] %vm268, %v1231
    %s1244 = scalar_lea.vmem [#allocation7], 82
    %1245 = vst.msk [vmem:[%s1244] ss:$8 sm:$0x3] %vm268, %v1232
    %1246 = vst.msk [vmem:[%s1244] ss:$8 sm:$0x0] %vm268, %v1232
    %s1247 = scalar_lea.vmem [#allocation7], 114
    %1248 = vst.msk [vmem:[%s1247] ss:$8 sm:$0x3] %vm268, %v1233
    %1249 = vst.msk [vmem:[%s1247] ss:$8 sm:$0x0] %vm268, %v1233
    %s1250 = sld [smem:[#allocation2 + $0x580]]
    %v1251 = vstv %s1250
    %v1252 = vmul.f32 %v59, %v1251
    %v1253 = vmul.f32 %v60, %v1251
    %s1254 = sld [smem:[#allocation2 + $0x581]]
    %v1255 = vstv %s1254
    %v1256 = vmul.f32 %v76, %v1255
    %v1257 = vmul.f32 %v77, %v1255
    %v1258 = vadd.f32 %v1252, %v1256
    %v1259 = vadd.f32 %v1253, %v1257
    %s1260 = sld [smem:[#allocation2 + $0x582]]
    %v1261 = vstv %s1260
    %v1262 = vmul.f32 %v93, %v1261
    %v1263 = vmul.f32 %v94, %v1261
    %v1264 = vadd.f32 %v1258, %v1262
    %v1265 = vadd.f32 %v1259, %v1263
    %s1266 = sld [smem:[#allocation2 + $0x583]]
    %v1267 = vstv %s1266
    %v1268 = vmul.f32 %v110, %v1267
    %v1269 = vmul.f32 %v111, %v1267
    %v1270 = vadd.f32 %v1264, %v1268
    %v1271 = vadd.f32 %v1265, %v1269
    %s1272 = sld [smem:[#allocation2 + $0x584]]
    %v1273 = vstv %s1272
    %v1274 = vmul.f32 %v37, %v1273
    %v1276 = vcombine.high %v1274, %v1274
    %v1278 = vadd.f32 %v1270, %v1274
    %v1279 = vadd.f32 %v1271, %v1276
    %s1280 = sld [smem:[#allocation2 + $0x585]]
    %v1281 = vstv %s1280
    %v1282 = vmul.f32 %v127, %v1281
    %v1283 = vmul.f32 %v128, %v1281
    %v1284 = vadd.f32 %v1278, %v1282
    %v1285 = vadd.f32 %v1279, %v1283
    %s1286 = sld [smem:[#allocation2 + $0x586]]
    %v1287 = vstv %s1286
    %v1288 = vmul.f32 %v144, %v1287
    %v1289 = vmul.f32 %v145, %v1287
    %v1290 = vadd.f32 %v1284, %v1288
    %v1291 = vadd.f32 %v1285, %v1289
    %s1292 = sld [smem:[#allocation2 + $0x587]]
    %v1293 = vstv %s1292
    %v1294 = vmul.f32 %v161, %v1293
    %v1295 = vmul.f32 %v162, %v1293
    %v1296 = vadd.f32 %v1290, %v1294
    %v1297 = vadd.f32 %v1291, %v1295
    %s1298 = sld [smem:[#allocation2 + $0x588]]
    %v1299 = vstv %s1298
    %v1300 = vmul.f32 %v178, %v1299
    %v1301 = vmul.f32 %v179, %v1299
    %v1302 = vadd.f32 %v1296, %v1300
    %v1303 = vadd.f32 %v1297, %v1301
    %v1306 = vcombine.low %v1302, %v1303
    %v1308 = vunpack.c.l.s4 1966171168
    %v1309 = vunpack.c.0.s8 %v1308
    %v1310 = vlaneseq
    %v1311 = vshrl.u32 %v1310, 7
    %v1312 = vsub.s32 %v1309, %v1311
    %v1313 = vrot.slane %v1306, %v1312
    %v1314 = vcombine.high %v1313, %v1313
    %v1316 = vunpack.c.l.s4 1966171168
    %v1317 = vunpack.c.0.s8 %v1316
    %v1318 = vlaneseq
    %v1319 = vshrl.u32 %v1318, 7
    %v1320 = vsub.s32 %v1317, %v1319
    %v1321 = vrot.slane %v1313, %v1320
    %v1323 = vunpack.c.l.s4 1966171168
    %v1324 = vunpack.c.0.s8 %v1323
    %v1325 = vlaneseq
    %v1326 = vshrl.u32 %v1325, 7
    %v1327 = vsub.s32 %v1324, %v1326
    %v1328 = vrot.slane %v1314, %v1327
    %v1329 = vcombine.high %v1321, %v1321
    %v1330 = vcombine.high %v1328, %v1328
    %s1335 = scalar_lea.vmem [#allocation7], 19
    %1336 = vst.msk [vmem:[%s1335] ss:$8 sm:$0x3] %vm268, %v1321
    %1337 = vst.msk [vmem:[%s1335] ss:$8 sm:$0x0] %vm268, %v1321
    %s1338 = scalar_lea.vmem [#allocation7], 51
    %1339 = vst.msk [vmem:[%s1338] ss:$8 sm:$0x3] %vm268, %v1328
    %1340 = vst.msk [vmem:[%s1338] ss:$8 sm:$0x0] %vm268, %v1328
    %s1341 = scalar_lea.vmem [#allocation7], 83
    %1342 = vst.msk [vmem:[%s1341] ss:$8 sm:$0x3] %vm268, %v1329
    %1343 = vst.msk [vmem:[%s1341] ss:$8 sm:$0x0] %vm268, %v1329
    %s1344 = scalar_lea.vmem [#allocation7], 115
    %1345 = vst.msk [vmem:[%s1344] ss:$8 sm:$0x3] %vm268, %v1330
    %1346 = vst.msk [vmem:[%s1344] ss:$8 sm:$0x0] %vm268, %v1330
    %s1347 = sld [smem:[#allocation2 + $0x600]]
    %v1348 = vstv %s1347
    %v1349 = vmul.f32 %v59, %v1348
    %v1350 = vmul.f32 %v60, %v1348
    %s1351 = sld [smem:[#allocation2 + $0x601]]
    %v1352 = vstv %s1351
    %v1353 = vmul.f32 %v76, %v1352
    %v1354 = vmul.f32 %v77, %v1352
    %v1355 = vadd.f32 %v1349, %v1353
    %v1356 = vadd.f32 %v1350, %v1354
    %s1357 = sld [smem:[#allocation2 + $0x602]]
    %v1358 = vstv %s1357
    %v1359 = vmul.f32 %v93, %v1358
    %v1360 = vmul.f32 %v94, %v1358
    %v1361 = vadd.f32 %v1355, %v1359
    %v1362 = vadd.f32 %v1356, %v1360
    %s1363 = sld [smem:[#allocation2 + $0x603]]
    %v1364 = vstv %s1363
    %v1365 = vmul.f32 %v110, %v1364
    %v1366 = vmul.f32 %v111, %v1364
    %v1367 = vadd.f32 %v1361, %v1365
    %v1368 = vadd.f32 %v1362, %v1366
    %s1369 = sld [smem:[#allocation2 + $0x604]]
    %v1370 = vstv %s1369
    %v1371 = vmul.f32 %v37, %v1370
    %v1373 = vcombine.high %v1371, %v1371
    %v1375 = vadd.f32 %v1367, %v1371
    %v1376 = vadd.f32 %v1368, %v1373
    %s1377 = sld [smem:[#allocation2 + $0x605]]
    %v1378 = vstv %s1377
    %v1379 = vmul.f32 %v127, %v1378
    %v1380 = vmul.f32 %v128, %v1378
    %v1381 = vadd.f32 %v1375, %v1379
    %v1382 = vadd.f32 %v1376, %v1380
    %s1383 = sld [smem:[#allocation2 + $0x606]]
    %v1384 = vstv %s1383
    %v1385 = vmul.f32 %v144, %v1384
    %v1386 = vmul.f32 %v145, %v1384
    %v1387 = vadd.f32 %v1381, %v1385
    %v1388 = vadd.f32 %v1382, %v1386
    %s1389 = sld [smem:[#allocation2 + $0x607]]
    %v1390 = vstv %s1389
    %v1391 = vmul.f32 %v161, %v1390
    %v1392 = vmul.f32 %v162, %v1390
    %v1393 = vadd.f32 %v1387, %v1391
    %v1394 = vadd.f32 %v1388, %v1392
    %s1395 = sld [smem:[#allocation2 + $0x608]]
    %v1396 = vstv %s1395
    %v1397 = vmul.f32 %v178, %v1396
    %v1398 = vmul.f32 %v179, %v1396
    %v1399 = vadd.f32 %v1393, %v1397
    %v1400 = vadd.f32 %v1394, %v1398
    %v1403 = vcombine.low %v1399, %v1400
    %v1405 = vunpack.c.l.s4 1966171168
    %v1406 = vunpack.c.0.s8 %v1405
    %v1407 = vlaneseq
    %v1408 = vshrl.u32 %v1407, 7
    %v1409 = vsub.s32 %v1406, %v1408
    %v1410 = vrot.slane %v1403, %v1409
    %v1411 = vcombine.high %v1410, %v1410
    %v1413 = vunpack.c.l.s4 1966171168
    %v1414 = vunpack.c.0.s8 %v1413
    %v1415 = vlaneseq
    %v1416 = vshrl.u32 %v1415, 7
    %v1417 = vsub.s32 %v1414, %v1416
    %v1418 = vrot.slane %v1410, %v1417
    %v1420 = vunpack.c.l.s4 1966171168
    %v1421 = vunpack.c.0.s8 %v1420
    %v1422 = vlaneseq
    %v1423 = vshrl.u32 %v1422, 7
    %v1424 = vsub.s32 %v1421, %v1423
    %v1425 = vrot.slane %v1411, %v1424
    %v1426 = vcombine.high %v1418, %v1418
    %v1427 = vcombine.high %v1425, %v1425
    %s1432 = scalar_lea.vmem [#allocation7], 20
    %1433 = vst.msk [vmem:[%s1432] ss:$8 sm:$0x3] %vm268, %v1418
    %1434 = vst.msk [vmem:[%s1432] ss:$8 sm:$0x0] %vm268, %v1418
    %s1435 = scalar_lea.vmem [#allocation7], 52
    %1436 = vst.msk [vmem:[%s1435] ss:$8 sm:$0x3] %vm268, %v1425
    %1437 = vst.msk [vmem:[%s1435] ss:$8 sm:$0x0] %vm268, %v1425
    %s1438 = scalar_lea.vmem [#allocation7], 84
    %1439 = vst.msk [vmem:[%s1438] ss:$8 sm:$0x3] %vm268, %v1426
    %1440 = vst.msk [vmem:[%s1438] ss:$8 sm:$0x0] %vm268, %v1426
    %s1441 = scalar_lea.vmem [#allocation7], 116
    %1442 = vst.msk [vmem:[%s1441] ss:$8 sm:$0x3] %vm268, %v1427
    %1443 = vst.msk [vmem:[%s1441] ss:$8 sm:$0x0] %vm268, %v1427
    %s1444 = sld [smem:[#allocation2 + $0x680]]
    %v1445 = vstv %s1444
    %v1446 = vmul.f32 %v59, %v1445
    %v1447 = vmul.f32 %v60, %v1445
    %s1448 = sld [smem:[#allocation2 + $0x681]]
    %v1449 = vstv %s1448
    %v1450 = vmul.f32 %v76, %v1449
    %v1451 = vmul.f32 %v77, %v1449
    %v1452 = vadd.f32 %v1446, %v1450
    %v1453 = vadd.f32 %v1447, %v1451
    %s1454 = sld [smem:[#allocation2 + $0x682]]
    %v1455 = vstv %s1454
    %v1456 = vmul.f32 %v93, %v1455
    %v1457 = vmul.f32 %v94, %v1455
    %v1458 = vadd.f32 %v1452, %v1456
    %v1459 = vadd.f32 %v1453, %v1457
    %s1460 = sld [smem:[#allocation2 + $0x683]]
    %v1461 = vstv %s1460
    %v1462 = vmul.f32 %v110, %v1461
    %v1463 = vmul.f32 %v111, %v1461
    %v1464 = vadd.f32 %v1458, %v1462
    %v1465 = vadd.f32 %v1459, %v1463
    %s1466 = sld [smem:[#allocation2 + $0x684]]
    %v1467 = vstv %s1466
    %v1468 = vmul.f32 %v37, %v1467
    %v1470 = vcombine.high %v1468, %v1468
    %v1472 = vadd.f32 %v1464, %v1468
    %v1473 = vadd.f32 %v1465, %v1470
    %s1474 = sld [smem:[#allocation2 + $0x685]]
    %v1475 = vstv %s1474
    %v1476 = vmul.f32 %v127, %v1475
    %v1477 = vmul.f32 %v128, %v1475
    %v1478 = vadd.f32 %v1472, %v1476
    %v1479 = vadd.f32 %v1473, %v1477
    %s1480 = sld [smem:[#allocation2 + $0x686]]
    %v1481 = vstv %s1480
    %v1482 = vmul.f32 %v144, %v1481
    %v1483 = vmul.f32 %v145, %v1481
    %v1484 = vadd.f32 %v1478, %v1482
    %v1485 = vadd.f32 %v1479, %v1483
    %s1486 = sld [smem:[#allocation2 + $0x687]]
    %v1487 = vstv %s1486
    %v1488 = vmul.f32 %v161, %v1487
    %v1489 = vmul.f32 %v162, %v1487
    %v1490 = vadd.f32 %v1484, %v1488
    %v1491 = vadd.f32 %v1485, %v1489
    %s1492 = sld [smem:[#allocation2 + $0x688]]
    %v1493 = vstv %s1492
    %v1494 = vmul.f32 %v178, %v1493
    %v1495 = vmul.f32 %v179, %v1493
    %v1496 = vadd.f32 %v1490, %v1494
    %v1497 = vadd.f32 %v1491, %v1495
    %v1500 = vcombine.low %v1496, %v1497
    %v1502 = vunpack.c.l.s4 1966171168
    %v1503 = vunpack.c.0.s8 %v1502
    %v1504 = vlaneseq
    %v1505 = vshrl.u32 %v1504, 7
    %v1506 = vsub.s32 %v1503, %v1505
    %v1507 = vrot.slane %v1500, %v1506
    %v1508 = vcombine.high %v1507, %v1507
    %v1510 = vunpack.c.l.s4 1966171168
    %v1511 = vunpack.c.0.s8 %v1510
    %v1512 = vlaneseq
    %v1513 = vshrl.u32 %v1512, 7
    %v1514 = vsub.s32 %v1511, %v1513
    %v1515 = vrot.slane %v1507, %v1514
    %v1517 = vunpack.c.l.s4 1966171168
    %v1518 = vunpack.c.0.s8 %v1517
    %v1519 = vlaneseq
    %v1520 = vshrl.u32 %v1519, 7
    %v1521 = vsub.s32 %v1518, %v1520
    %v1522 = vrot.slane %v1508, %v1521
    %v1523 = vcombine.high %v1515, %v1515
    %v1524 = vcombine.high %v1522, %v1522
    %s1529 = scalar_lea.vmem [#allocation7], 21
    %1530 = vst.msk [vmem:[%s1529] ss:$8 sm:$0x3] %vm268, %v1515
    %1531 = vst.msk [vmem:[%s1529] ss:$8 sm:$0x0] %vm268, %v1515
    %s1532 = scalar_lea.vmem [#allocation7], 53
    %1533 = vst.msk [vmem:[%s1532] ss:$8 sm:$0x3] %vm268, %v1522
    %1534 = vst.msk [vmem:[%s1532] ss:$8 sm:$0x0] %vm268, %v1522
    %s1535 = scalar_lea.vmem [#allocation7], 85
    %1536 = vst.msk [vmem:[%s1535] ss:$8 sm:$0x3] %vm268, %v1523
    %1537 = vst.msk [vmem:[%s1535] ss:$8 sm:$0x0] %vm268, %v1523
    %s1538 = scalar_lea.vmem [#allocation7], 117
    %1539 = vst.msk [vmem:[%s1538] ss:$8 sm:$0x3] %vm268, %v1524
    %1540 = vst.msk [vmem:[%s1538] ss:$8 sm:$0x0] %vm268, %v1524
    %s1541 = sld [smem:[#allocation2 + $0x700]]
    %v1542 = vstv %s1541
    %v1543 = vmul.f32 %v59, %v1542
    %v1544 = vmul.f32 %v60, %v1542
    %s1545 = sld [smem:[#allocation2 + $0x701]]
    %v1546 = vstv %s1545
    %v1547 = vmul.f32 %v76, %v1546
    %v1548 = vmul.f32 %v77, %v1546
    %v1549 = vadd.f32 %v1543, %v1547
    %v1550 = vadd.f32 %v1544, %v1548
    %s1551 = sld [smem:[#allocation2 + $0x702]]
    %v1552 = vstv %s1551
    %v1553 = vmul.f32 %v93, %v1552
    %v1554 = vmul.f32 %v94, %v1552
    %v1555 = vadd.f32 %v1549, %v1553
    %v1556 = vadd.f32 %v1550, %v1554
    %s1557 = sld [smem:[#allocation2 + $0x703]]
    %v1558 = vstv %s1557
    %v1559 = vmul.f32 %v110, %v1558
    %v1560 = vmul.f32 %v111, %v1558
    %v1561 = vadd.f32 %v1555, %v1559
    %v1562 = vadd.f32 %v1556, %v1560
    %s1563 = sld [smem:[#allocation2 + $0x704]]
    %v1564 = vstv %s1563
    %v1565 = vmul.f32 %v37, %v1564
    %v1567 = vcombine.high %v1565, %v1565
    %v1569 = vadd.f32 %v1561, %v1565
    %v1570 = vadd.f32 %v1562, %v1567
    %s1571 = sld [smem:[#allocation2 + $0x705]]
    %v1572 = vstv %s1571
    %v1573 = vmul.f32 %v127, %v1572
    %v1574 = vmul.f32 %v128, %v1572
    %v1575 = vadd.f32 %v1569, %v1573
    %v1576 = vadd.f32 %v1570, %v1574
    %s1577 = sld [smem:[#allocation2 + $0x706]]
    %v1578 = vstv %s1577
    %v1579 = vmul.f32 %v144, %v1578
    %v1580 = vmul.f32 %v145, %v1578
    %v1581 = vadd.f32 %v1575, %v1579
    %v1582 = vadd.f32 %v1576, %v1580
    %s1583 = sld [smem:[#allocation2 + $0x707]]
    %v1584 = vstv %s1583
    %v1585 = vmul.f32 %v161, %v1584
    %v1586 = vmul.f32 %v162, %v1584
    %v1587 = vadd.f32 %v1581, %v1585
    %v1588 = vadd.f32 %v1582, %v1586
    %s1589 = sld [smem:[#allocation2 + $0x708]]
    %v1590 = vstv %s1589
    %v1591 = vmul.f32 %v178, %v1590
    %v1592 = vmul.f32 %v179, %v1590
    %v1593 = vadd.f32 %v1587, %v1591
    %v1594 = vadd.f32 %v1588, %v1592
    %v1597 = vcombine.low %v1593, %v1594
    %v1599 = vunpack.c.l.s4 1966171168
    %v1600 = vunpack.c.0.s8 %v1599
    %v1601 = vlaneseq
    %v1602 = vshrl.u32 %v1601, 7
    %v1603 = vsub.s32 %v1600, %v1602
    %v1604 = vrot.slane %v1597, %v1603
    %v1605 = vcombine.high %v1604, %v1604
    %v1607 = vunpack.c.l.s4 1966171168
    %v1608 = vunpack.c.0.s8 %v1607
    %v1609 = vlaneseq
    %v1610 = vshrl.u32 %v1609, 7
    %v1611 = vsub.s32 %v1608, %v1610
    %v1612 = vrot.slane %v1604, %v1611
    %v1614 = vunpack.c.l.s4 1966171168
    %v1615 = vunpack.c.0.s8 %v1614
    %v1616 = vlaneseq
    %v1617 = vshrl.u32 %v1616, 7
    %v1618 = vsub.s32 %v1615, %v1617
    %v1619 = vrot.slane %v1605, %v1618
    %v1620 = vcombine.high %v1612, %v1612
    %v1621 = vcombine.high %v1619, %v1619
    %s1626 = scalar_lea.vmem [#allocation7], 22
    %1627 = vst.msk [vmem:[%s1626] ss:$8 sm:$0x3] %vm268, %v1612
    %1628 = vst.msk [vmem:[%s1626] ss:$8 sm:$0x0] %vm268, %v1612
    %s1629 = scalar_lea.vmem [#allocation7], 54
    %1630 = vst.msk [vmem:[%s1629] ss:$8 sm:$0x3] %vm268, %v1619
    %1631 = vst.msk [vmem:[%s1629] ss:$8 sm:$0x0] %vm268, %v1619
    %s1632 = scalar_lea.vmem [#allocation7], 86
    %1633 = vst.msk [vmem:[%s1632] ss:$8 sm:$0x3] %vm268, %v1620
    %1634 = vst.msk [vmem:[%s1632] ss:$8 sm:$0x0] %vm268, %v1620
    %s1635 = scalar_lea.vmem [#allocation7], 118
    %1636 = vst.msk [vmem:[%s1635] ss:$8 sm:$0x3] %vm268, %v1621
    %1637 = vst.msk [vmem:[%s1635] ss:$8 sm:$0x0] %vm268, %v1621
    %s1638 = sld [smem:[#allocation2 + $0x780]]
    %v1639 = vstv %s1638
    %v1640 = vmul.f32 %v59, %v1639
    %v1641 = vmul.f32 %v60, %v1639
    %s1642 = sld [smem:[#allocation2 + $0x781]]
    %v1643 = vstv %s1642
    %v1644 = vmul.f32 %v76, %v1643
    %v1645 = vmul.f32 %v77, %v1643
    %v1646 = vadd.f32 %v1640, %v1644
    %v1647 = vadd.f32 %v1641, %v1645
    %s1648 = sld [smem:[#allocation2 + $0x782]]
    %v1649 = vstv %s1648
    %v1650 = vmul.f32 %v93, %v1649
    %v1651 = vmul.f32 %v94, %v1649
    %v1652 = vadd.f32 %v1646, %v1650
    %v1653 = vadd.f32 %v1647, %v1651
    %s1654 = sld [smem:[#allocation2 + $0x783]]
    %v1655 = vstv %s1654
    %v1656 = vmul.f32 %v110, %v1655
    %v1657 = vmul.f32 %v111, %v1655
    %v1658 = vadd.f32 %v1652, %v1656
    %v1659 = vadd.f32 %v1653, %v1657
    %s1660 = sld [smem:[#allocation2 + $0x784]]
    %v1661 = vstv %s1660
    %v1662 = vmul.f32 %v37, %v1661
    %v1664 = vcombine.high %v1662, %v1662
    %v1666 = vadd.f32 %v1658, %v1662
    %v1667 = vadd.f32 %v1659, %v1664
    %s1668 = sld [smem:[#allocation2 + $0x785]]
    %v1669 = vstv %s1668
    %v1670 = vmul.f32 %v127, %v1669
    %v1671 = vmul.f32 %v128, %v1669
    %v1672 = vadd.f32 %v1666, %v1670
    %v1673 = vadd.f32 %v1667, %v1671
    %s1674 = sld [smem:[#allocation2 + $0x786]]
    %v1675 = vstv %s1674
    %v1676 = vmul.f32 %v144, %v1675
    %v1677 = vmul.f32 %v145, %v1675
    %v1678 = vadd.f32 %v1672, %v1676
    %v1679 = vadd.f32 %v1673, %v1677
    %s1680 = sld [smem:[#allocation2 + $0x787]]
    %v1681 = vstv %s1680
    %v1682 = vmul.f32 %v161, %v1681
    %v1683 = vmul.f32 %v162, %v1681
    %v1684 = vadd.f32 %v1678, %v1682
    %v1685 = vadd.f32 %v1679, %v1683
    %s1686 = sld [smem:[#allocation2 + $0x788]]
    %v1687 = vstv %s1686
    %v1688 = vmul.f32 %v178, %v1687
    %v1689 = vmul.f32 %v179, %v1687
    %v1690 = vadd.f32 %v1684, %v1688
    %v1691 = vadd.f32 %v1685, %v1689
    %v1694 = vcombine.low %v1690, %v1691
    %v1696 = vunpack.c.l.s4 1966171168
    %v1697 = vunpack.c.0.s8 %v1696
    %v1698 = vlaneseq
    %v1699 = vshrl.u32 %v1698, 7
    %v1700 = vsub.s32 %v1697, %v1699
    %v1701 = vrot.slane %v1694, %v1700
    %v1702 = vcombine.high %v1701, %v1701
    %v1704 = vunpack.c.l.s4 1966171168
    %v1705 = vunpack.c.0.s8 %v1704
    %v1706 = vlaneseq
    %v1707 = vshrl.u32 %v1706, 7
    %v1708 = vsub.s32 %v1705, %v1707
    %v1709 = vrot.slane %v1701, %v1708
    %v1711 = vunpack.c.l.s4 1966171168
    %v1712 = vunpack.c.0.s8 %v1711
    %v1713 = vlaneseq
    %v1714 = vshrl.u32 %v1713, 7
    %v1715 = vsub.s32 %v1712, %v1714
    %v1716 = vrot.slane %v1702, %v1715
    %v1717 = vcombine.high %v1709, %v1709
    %v1718 = vcombine.high %v1716, %v1716
    %s1723 = scalar_lea.vmem [#allocation7], 23
    %1724 = vst.msk [vmem:[%s1723] ss:$8 sm:$0x3] %vm268, %v1709
    %1725 = vst.msk [vmem:[%s1723] ss:$8 sm:$0x0] %vm268, %v1709
    %s1726 = scalar_lea.vmem [#allocation7], 55
    %1727 = vst.msk [vmem:[%s1726] ss:$8 sm:$0x3] %vm268, %v1716
    %1728 = vst.msk [vmem:[%s1726] ss:$8 sm:$0x0] %vm268, %v1716
    %s1729 = scalar_lea.vmem [#allocation7], 87
    %1730 = vst.msk [vmem:[%s1729] ss:$8 sm:$0x3] %vm268, %v1717
    %1731 = vst.msk [vmem:[%s1729] ss:$8 sm:$0x0] %vm268, %v1717
    %s1732 = scalar_lea.vmem [#allocation7], 119
    %1733 = vst.msk [vmem:[%s1732] ss:$8 sm:$0x3] %vm268, %v1718
    %1734 = vst.msk [vmem:[%s1732] ss:$8 sm:$0x0] %vm268, %v1718
    // Predicated region
    $region18: #{tpu_custom_call.1} parent=1 // pred_check
      _
    $region19: #{tpu_custom_call.1} parent=1 // pred_check_branch
      %1736 = sbr.rel (0) target = $region21
    $region20: #{tpu_custom_call.1} parent=1 // pred_region
      %s1738 = ssub.s32 2048, 2048
      %1739 = vsyncadd [#allocation4], %s1738
      %s1740 = sshll.u32 [#allocation7], 4
      %s1741 = int_to_ptr.vmem [resolvable:$true] %s1740
      %1746 = dma.vmem_to_hbm [thread:$0]  %s1741, 2048, %s2, [#allocation4], 256, 256, 16
    $region21: #{tpu_custom_call.1} parent=1 // pred_fallthru
      _
    // Predicated region
    $region22: #{tpu_custom_call.1} parent=1 // pred_check
      _
    $region23: #{tpu_custom_call.1} parent=1 // pred_check_branch
      %1748 = sbr.rel (0) target = $region25
    $region24: #{tpu_custom_call.1} parent=1 // pred_region
      %1749 = dma.done [#allocation4], 2048
    $region25: #{tpu_custom_call.1} parent=1 // pred_fallthru
      _
    %1750 = vsyncpa [#allocation3], 1
    %1751 = vsyncpa [#allocation4], 1
    %1752 = vsyncpa [#allocation5], 1

</llo_original>
